<compile_context>
chip_gen: v7x
topology: tpu7x:2x2x1
jax: 0.10.0
libtpu: 0.0.40
codegen_flags: <defaults>
</compile_context>

<pallas_src>
import functools
import math

import jax
import jax.numpy as jnp
import numpy as np
from jax.experimental import pallas as pl
from jax.experimental.pallas import tpu as pltpu


# ---------------------------------------------------------------------------
# Kernel: one grid step = (batch b, head-group g, query tile qi).
# ---------------------------------------------------------------------------
def _bert_attn_kernel(hs_ref, wq_ref, wk_ref, wv_ref, bq_ref, bk_ref, bv_ref,
                      mask_ref, ctx_ref, scores_ref,
                      k_scr, v_scr, ctx_scr, *,
                      heads_per_block, head_dim, q_tile, inv_scale,
                      qk_dtype, v_dtype):
    G, D, TQ = heads_per_block, head_dim, q_tile
    g = pl.program_id(1)
    qi = pl.program_id(2)
    row0 = pl.multiple_of(qi * TQ, TQ)

    mask = mask_ref[0]                                   # (1, S) additive key mask

    # K / V projections: computed once per (batch, head-group) and kept in VMEM
    # scratch for all query tiles of that (b, g).
    @pl.when(qi == 0)
    def _():
        hs = hs_ref[0]                                   # (S, H)
        k = jnp.dot(hs.astype(qk_dtype), wk_ref[g].astype(qk_dtype),
                    preferred_element_type=jnp.float32) + bk_ref[g]
        k_scr[...] = k.astype(k_scr.dtype)
        v = jnp.dot(hs.astype(v_dtype), wv_ref[g].astype(v_dtype),
                    preferred_element_type=jnp.float32) + bv_ref[g]
        v_scr[...] = v.astype(v_scr.dtype)

    # Q projection for this query tile; 1/sqrt(D) folded into Q (TQ*G*D muls).
    hs_q = hs_ref[0, pl.ds(row0, TQ), :]                 # (TQ, H)
    q = (jnp.dot(hs_q.astype(qk_dtype), wq_ref[g].astype(qk_dtype),
                 preferred_element_type=jnp.float32) + bq_ref[g]) * inv_scale

    k = k_scr[...].astype(qk_dtype)                      # (S, GD)
    v = v_scr[...].astype(v_dtype)                       # (S, GD)

    for h in range(G):                                   # static unroll; G small
        sl = slice(h * D, (h + 1) * D)
        # scores = (Q/sqrt(D)) K^T + mask on the MXU (contraction dim = D).
        s = jax.lax.dot_general(q[:, sl].astype(qk_dtype), k[:, sl],
                                (((1,), (1,)), ((), ())),
                                preferred_element_type=jnp.float32)
        s = s + mask                                     # (TQ, S)
        scores_ref[0, h] = s.astype(scores_ref.dtype)    # module output (pre-softmax)

        # Softmax over the key axis in f32; denominator reciprocal on the EUP.
        m = jnp.max(s, axis=-1, keepdims=True)
        e = jnp.exp(s - m)
        p = e * pl.reciprocal(jnp.sum(e, axis=-1, keepdims=True), approx=True)
        # TODO(synk): attention-prob dropout omitted (eval semantics, p = 0).

        ctx_scr[:, sl] = jnp.dot(p.astype(v_dtype), v[:, sl],
                                 preferred_element_type=jnp.float32)

    # Single lane-dense store, directly in the (B, S, H) output layout.
    ctx_ref[0] = ctx_scr[...].astype(ctx_ref.dtype)


# ---------------------------------------------------------------------------
# Wrapper helpers.
# ---------------------------------------------------------------------------
def _choose_head_group(num_heads, head_dim, hidden, lane_target):
    """Largest divisor G of num_heads with G*D <= lane_target and a lane-legal
    (multiple-of-128) group width; fall back to all heads (GD == hidden)."""
    desired = max(1, lane_target // head_dim)
    for g in range(min(num_heads, desired), 0, -1):
        if num_heads % g == 0 and (g * head_dim) % 128 == 0:
            return g
    return num_heads


def _q_tile_candidates(seq_len, target):
    cands = [t for t in range(min(seq_len, target), 0, -1)
             if seq_len % t == 0 and (t % 8 == 0 or t == seq_len)]
    return cands or [seq_len]


def _vmem_estimate(S, H, GD, G, TQ, scores_bytes, k_bytes, v_bytes):
    f32 = 4
    blocks = (2 * S * H * f32               # hidden_states (double-buffered)
              + 2 * 3 * H * H * f32         # q/k/v weights (resident, 2 bufs)
              + 2 * 3 * H * f32             # biases
              + 2 * S * f32                 # mask
              + 2 * TQ * GD * f32           # ctx output block
              + 2 * G * TQ * S * scores_bytes)  # scores output block
    scratch = S * GD * (k_bytes + v_bytes) + TQ * GD * f32
    interm = TQ * GD * f32 + 4 * TQ * S * f32 + 2 * S * GD * f32
    return blocks + scratch + interm + (2 << 20)


# ---------------------------------------------------------------------------
# Wrapper.
# ---------------------------------------------------------------------------
def bert_self_attention(hidden_states, attention_mask, params, num_heads, *,
                        lane_target=256, q_tile_target=512,
                        matmul_precision="mixed", scores_dtype=jnp.float32):
    """params: wq/wk/wv are (H_in, H_out) (= PyTorch nn.Linear weight transposed),
    bq/bk/bv are (H,).  attention_mask is the additive key-padding mask (B,1,1,S)."""
    B, S, H = hidden_states.shape
    if H % num_heads != 0:
        raise ValueError("hidden size must be a multiple of num_heads")
    D = H // num_heads
    if attention_mask.shape != (B, 1, 1, S):
        # TODO(synk): per-query masks of shape (B, 1, S, S) are not supported here.
        raise ValueError("attention_mask must be an additive (B, 1, 1, S) mask")

    if matmul_precision == "f32":
        qk_dtype = v_dtype = jnp.float32
    elif matmul_precision == "bf16":
        qk_dtype = v_dtype = jnp.bfloat16
    elif matmul_precision == "mixed":
        qk_dtype, v_dtype = jnp.float32, jnp.bfloat16   # scores stay f32-accurate
    else:
        raise ValueError("matmul_precision must be 'f32', 'mixed' or 'bf16'")

    G = _choose_head_group(num_heads, D, H, lane_target)
    NG = num_heads // G
    GD = G * D

    # Weights reshaped so the g-th head group is a leading-axis slice: resident
    # in VMEM with a constant index_map (DMA'd once), indexed with w_ref[g] in
    # the kernel (no dynamic lane-dim slicing).
    def group_w(w):
        return jnp.transpose(w.reshape(H, NG, GD), (1, 0, 2))   # (NG, H, GD)

    def group_b(b):
        return b.reshape(NG, 1, GD)

    wq, wk, wv = group_w(params["wq"]), group_w(params["wk"]), group_w(params["wv"])
    bq, bk, bv = group_b(params["bq"]), group_b(params["bk"]), group_b(params["bv"])
    mask = attention_mask.reshape(B, 1, S)

    # VMEM guard: pick the largest query tile whose footprint fits this chip's
    # physical VMEM (v7x = 64 MiB), and clamp vmem_limit to capacity.
    try:
        vmem_cap = int(pltpu.get_tpu_info().vmem_capacity_bytes)
    except Exception:  # conservative fallback
        vmem_cap = 64 << 20
    scores_bytes = np.dtype(scores_dtype).itemsize
    k_bytes = np.dtype(qk_dtype).itemsize
    v_bytes = np.dtype(v_dtype).itemsize
    budget = int(0.9 * vmem_cap)
    cands = _q_tile_candidates(S, q_tile_target)
    TQ = cands[-1]
    for t in cands:
        if _vmem_estimate(S, H, GD, G, t, scores_bytes, k_bytes, v_bytes) <= budget:
            TQ = t
            break
    NQ = S // TQ
    vmem_limit = int(min(max(_vmem_estimate(S, H, GD, G, TQ,
                                            scores_bytes, k_bytes, v_bytes),
                             16 << 20), vmem_cap))

    kernel = functools.partial(
        _bert_attn_kernel, heads_per_block=G, head_dim=D, q_tile=TQ,
        inv_scale=1.0 / math.sqrt(D), qk_dtype=qk_dtype, v_dtype=v_dtype)

    w_spec = pl.BlockSpec((NG, H, GD), lambda b, g, qi: (0, 0, 0))   # resident
    b_spec = pl.BlockSpec((NG, 1, GD), lambda b, g, qi: (0, 0, 0))   # resident

    ctx, scores = pl.pallas_call(
        kernel,
        out_shape=(
            jax.ShapeDtypeStruct((B, S, H), hidden_states.dtype),      # context
            jax.ShapeDtypeStruct((B, num_heads, S, S), scores_dtype),  # scores
        ),
        grid_spec=pltpu.PrefetchScalarGridSpec(
            num_scalar_prefetch=0,
            grid=(B, NG, NQ),
            in_specs=[
                pl.BlockSpec((1, S, H), lambda b, g, qi: (b, 0, 0)),   # hidden_states
                w_spec, w_spec, w_spec,                                # wq, wk, wv
                b_spec, b_spec, b_spec,                                # bq, bk, bv
                pl.BlockSpec((1, 1, S), lambda b, g, qi: (b, 0, 0)),   # additive mask
            ],
            out_specs=(
                pl.BlockSpec((1, TQ, GD), lambda b, g, qi: (b, qi, g)),     # ctx
                pl.BlockSpec((1, G, TQ, S), lambda b, g, qi: (b, g, qi, 0)),# scores
            ),
            scratch_shapes=[
                pltpu.VMEM((S, GD), qk_dtype),      # K (per batch/group)
                pltpu.VMEM((S, GD), v_dtype),       # V (per batch/group)
                pltpu.VMEM((TQ, GD), jnp.float32),  # ctx accumulator (lane-dense store)
            ]),
        compiler_params=pltpu.CompilerParams(
            # b and g are independent ("parallel") so v7x's 2 TensorCores can
            # shard them; the query-tile axis carries the K/V scratch -> "arbitrary".
            dimension_semantics=("parallel", "parallel", "arbitrary"),
            vmem_limit_bytes=vmem_limit),
    )(hidden_states, wq, wk, wv, bq, bk, bv, mask)

    return ctx, scores


# ---------------------------------------------------------------------------
# Pure-JAX reference (mirrors the PyTorch forward).
# ---------------------------------------------------------------------------
def reference(hidden_states, attention_mask, params, num_heads):
    B, S, H = hidden_states.shape
    D = H // num_heads

    def proj(w, b):
        x = hidden_states @ w + b
        return jnp.transpose(x.reshape(B, S, num_heads, D), (0, 2, 1, 3))

    q = proj(params["wq"], params["bq"])
    k = proj(params["wk"], params["bk"])
    v = proj(params["wv"], params["bv"])
    scores = jnp.einsum("bhfd,bhtd->bhft", q, k) / math.sqrt(D) + attention_mask
    probs = jax.nn.softmax(scores, axis=-1)
    ctx = jnp.einsum("bhft,bhtd->bhfd", probs, v)
    ctx = jnp.transpose(ctx, (0, 2, 1, 3)).reshape(B, S, H)
    return ctx, scores


if __name__ == "__main__":
    # Small synthetic config consistent with the module.
    B, S, H, num_heads = 2, 8, 32, 4

    key = jax.random.PRNGKey(0)
    k_hs, k_wq, k_wk, k_wv, k_bq, k_bk, k_bv = jax.random.split(key, 7)

    hidden_states = jax.random.normal(k_hs, (B, S, H), dtype=jnp.float32)
    params = {
        "wq": 0.02 * jax.random.normal(k_wq, (H, H), dtype=jnp.float32),
        "wk": 0.02 * jax.random.normal(k_wk, (H, H), dtype=jnp.float32),
        "wv": 0.02 * jax.random.normal(k_wv, (H, H), dtype=jnp.float32),
        "bq": 0.02 * jax.random.normal(k_bq, (H,), dtype=jnp.float32),
        "bk": 0.02 * jax.random.normal(k_bk, (H,), dtype=jnp.float32),
        "bv": 0.02 * jax.random.normal(k_bv, (H,), dtype=jnp.float32),
    }

    # Additive attention mask (B, 1, 1, S): mask out the last 2 keys of batch 1.
    mask_np = np.zeros((B, 1, 1, S), dtype=np.float32)
    mask_np[1, :, :, -2:] = -10000.0
    attention_mask = jnp.asarray(mask_np)

    ctx, scores = bert_self_attention(hidden_states, attention_mask, params, num_heads)
    jax.block_until_ready((ctx, scores))

    ref_ctx, ref_scores = reference(hidden_states, attention_mask, params, num_heads)
    # Scores: Q/K projection and QK^T stay f32 -> tight check.
    np.testing.assert_allclose(np.asarray(scores), np.asarray(ref_scores),
                               rtol=2e-5, atol=2e-5)
    # Context: bf16 V projection / P@V operands + EUP approx reciprocal.
    np.testing.assert_allclose(np.asarray(ctx), np.asarray(ref_ctx),
                               rtol=2e-2, atol=2e-3)

    print("KERNEL_OK")
</pallas_src>

<mosaic_0001>
module attributes {stable_mosaic.version = 11 : i64} {
  func.func @_bert_attn_kernel(%arg0: i32, %arg1: i32, %arg2: i32, %arg3: memref<1x8x32xf32, #tpu.memory_space<vmem>>, %arg4: memref<1x32x32xf32, #tpu.memory_space<vmem>>, %arg5: memref<1x32x32xf32, #tpu.memory_space<vmem>>, %arg6: memref<1x32x32xf32, #tpu.memory_space<vmem>>, %arg7: memref<1x1x32xf32, #tpu.memory_space<vmem>>, %arg8: memref<1x1x32xf32, #tpu.memory_space<vmem>>, %arg9: memref<1x1x32xf32, #tpu.memory_space<vmem>>, %arg10: memref<1x1x8xf32, #tpu.memory_space<vmem>>, %arg11: memref<1x8x32xf32, #tpu.memory_space<vmem>>, %arg12: memref<1x4x8x8xf32, #tpu.memory_space<vmem>>, %arg13: memref<8x32xf32, #tpu.memory_space<vmem>>, %arg14: memref<8x32xbf16, #tpu.memory_space<vmem>>, %arg15: memref<8x32xf32, #tpu.memory_space<vmem>>) attributes {dimension_semantics = [#tpu.dimension_semantics<parallel>, #tpu.dimension_semantics<parallel>, #tpu.dimension_semantics<arbitrary>], iteration_bounds = array<i64: 2, 1, 1>, scalar_prefetch = 0 : i64, scratch_operands = 3 : i64, tpu.core_type = #tpu.core_type<tc>, window_params = [{transform_indices = @transform_0, window_bounds = array<i64: 1, 8, 32>}, {pipeline_mode = #tpu.pipeline_mode<synchronous>, transform_indices = @transform_1, window_bounds = array<i64: 1, 32, 32>}, {pipeline_mode = #tpu.pipeline_mode<synchronous>, transform_indices = @transform_2, window_bounds = array<i64: 1, 32, 32>}, {pipeline_mode = #tpu.pipeline_mode<synchronous>, transform_indices = @transform_3, window_bounds = array<i64: 1, 32, 32>}, {pipeline_mode = #tpu.pipeline_mode<synchronous>, transform_indices = @transform_4, window_bounds = array<i64: 1, 1, 32>}, {pipeline_mode = #tpu.pipeline_mode<synchronous>, transform_indices = @transform_5, window_bounds = array<i64: 1, 1, 32>}, {pipeline_mode = #tpu.pipeline_mode<synchronous>, transform_indices = @transform_6, window_bounds = array<i64: 1, 1, 32>}, {transform_indices = @transform_7, window_bounds = array<i64: 1, 1, 8>}, {transform_indices = @transform_8, window_bounds = array<i64: 1, 8, 32>}, {transform_indices = @transform_9, window_bounds = array<i64: 1, 4, 8, 8>}]} {
    %c8_i32 = arith.constant 8 : i32
    %0 = arith.muli %arg2, %c8_i32 : i32
    %1 = tpu.assume_multiple %0, 8 : i32
    %c0 = arith.constant 0 : index
    %c0_0 = arith.constant 0 : index
    %c0_1 = arith.constant 0 : index
    %2 = vector.load %arg10[%c0, %c0_0, %c0_1] : memref<1x1x8xf32, #tpu.memory_space<vmem>>, vector<1x1x8xf32>
    %3 = vector.shape_cast %2 : vector<1x1x8xf32> to vector<1x8xf32>
    %c0_i32 = arith.constant 0 : i32
    %4 = arith.cmpi eq, %arg2, %c0_i32 : i32
    %5 = arith.extui %4 : i1 to i32
    %c0_i32_2 = arith.constant 0 : i32
    %6 = arith.cmpi ne, %5, %c0_i32_2 : i32
    scf.if %6 {
      %c0_53 = arith.constant 0 : index
      %c0_54 = arith.constant 0 : index
      %c0_55 = arith.constant 0 : index
      %115 = vector.load %arg3[%c0_53, %c0_54, %c0_55] : memref<1x8x32xf32, #tpu.memory_space<vmem>>, vector<1x8x32xf32>
      %116 = vector.shape_cast %115 : vector<1x8x32xf32> to vector<8x32xf32>
      %117 = arith.index_cast %arg1 : i32 to index
      %c0_56 = arith.constant 0 : index
      %c0_57 = arith.constant 0 : index
      %118 = vector.load %arg5[%117, %c0_56, %c0_57] : memref<1x32x32xf32, #tpu.memory_space<vmem>>, vector<1x32x32xf32>
      %119 = vector.shape_cast %118 : vector<1x32x32xf32> to vector<32x32xf32>
      %cst_58 = arith.constant dense<0.000000e+00> : vector<8x32xf32>
      %120 = tpu.matmul %116, %119, %cst_58 {dimension_numbers = #tpu.dot_dimension_numbers<[1], [0], [0], [1], [0, 0, 1, 1], [], []>} : vector<8x32xf32>, vector<32x32xf32>, vector<8x32xf32> -> vector<8x32xf32>
      %121 = arith.index_cast %arg1 : i32 to index
      %c0_59 = arith.constant 0 : index
      %c0_60 = arith.constant 0 : index
      %122 = vector.load %arg8[%121, %c0_59, %c0_60] : memref<1x1x32xf32, #tpu.memory_space<vmem>>, vector<1x1x32xf32>
      %123 = vector.shape_cast %122 : vector<1x1x32xf32> to vector<1x32xf32>
      %124 = vector.broadcast %123 : vector<1x32xf32> to vector<8x32xf32>
      %125 = arith.addf %120, %124 : vector<8x32xf32>
      %c0_61 = arith.constant 0 : index
      %c0_62 = arith.constant 0 : index
      %126 = vector.load %arg13[%c0_61, %c0_62] : memref<8x32xf32, #tpu.memory_space<vmem>>, vector<8x32xf32>
      tpu.vector_store %arg13[%c0_61, %c0_62], %125 {strides = array<i32>} : memref<8x32xf32, #tpu.memory_space<vmem>>, vector<8x32xf32>,
      %127 = arith.truncf %116 : vector<8x32xf32> to vector<8x32xbf16>
      %128 = arith.index_cast %arg1 : i32 to index
      %c0_63 = arith.constant 0 : index
      %c0_64 = arith.constant 0 : index
      %129 = vector.load %arg6[%128, %c0_63, %c0_64] : memref<1x32x32xf32, #tpu.memory_space<vmem>>, vector<1x32x32xf32>
      %130 = vector.shape_cast %129 : vector<1x32x32xf32> to vector<32x32xf32>
      %131 = arith.truncf %130 : vector<32x32xf32> to vector<32x32xbf16>
      %cst_65 = arith.constant dense<0.000000e+00> : vector<8x32xf32>
      %132 = tpu.matmul %127, %131, %cst_65 {dimension_numbers = #tpu.dot_dimension_numbers<[1], [0], [0], [1], [0, 0, 1, 1], [], []>} : vector<8x32xbf16>, vector<32x32xbf16>, vector<8x32xf32> -> vector<8x32xf32>
      %133 = arith.index_cast %arg1 : i32 to index
      %c0_66 = arith.constant 0 : index
      %c0_67 = arith.constant 0 : index
      %134 = vector.load %arg9[%133, %c0_66, %c0_67] : memref<1x1x32xf32, #tpu.memory_space<vmem>>, vector<1x1x32xf32>
      %135 = vector.shape_cast %134 : vector<1x1x32xf32> to vector<1x32xf32>
      %136 = vector.broadcast %135 : vector<1x32xf32> to vector<8x32xf32>
      %137 = arith.addf %132, %136 : vector<8x32xf32>
      %138 = arith.truncf %137 : vector<8x32xf32> to vector<8x32xbf16>
      %c0_68 = arith.constant 0 : index
      %c0_69 = arith.constant 0 : index
      %139 = vector.load %arg14[%c0_68, %c0_69] : memref<8x32xbf16, #tpu.memory_space<vmem>>, vector<8x32xbf16>
      tpu.vector_store %arg14[%c0_68, %c0_69], %138 {strides = array<i32>} : memref<8x32xbf16, #tpu.memory_space<vmem>>, vector<8x32xbf16>,
    } else {
    }
    %c0_3 = arith.constant 0 : index
    %7 = arith.index_cast %1 : i32 to index
    %c0_4 = arith.constant 0 : index
    %8 = vector.load %arg3[%c0_3, %7, %c0_4] : memref<1x8x32xf32, #tpu.memory_space<vmem>>, vector<1x8x32xf32>
    %9 = vector.shape_cast %8 : vector<1x8x32xf32> to vector<8x32xf32>
    %10 = arith.index_cast %arg1 : i32 to index
    %c0_5 = arith.constant 0 : index
    %c0_6 = arith.constant 0 : index
    %11 = vector.load %arg4[%10, %c0_5, %c0_6] : memref<1x32x32xf32, #tpu.memory_space<vmem>>, vector<1x32x32xf32>
    %12 = vector.shape_cast %11 : vector<1x32x32xf32> to vector<32x32xf32>
    %cst = arith.constant dense<0.000000e+00> : vector<8x32xf32>
    %13 = tpu.matmul %9, %12, %cst {dimension_numbers = #tpu.dot_dimension_numbers<[1], [0], [0], [1], [0, 0, 1, 1], [], []>} : vector<8x32xf32>, vector<32x32xf32>, vector<8x32xf32> -> vector<8x32xf32>
    %14 = arith.index_cast %arg1 : i32 to index
    %c0_7 = arith.constant 0 : index
    %c0_8 = arith.constant 0 : index
    %15 = vector.load %arg7[%14, %c0_7, %c0_8] : memref<1x1x32xf32, #tpu.memory_space<vmem>>, vector<1x1x32xf32>
    %16 = vector.shape_cast %15 : vector<1x1x32xf32> to vector<1x32xf32>
    %17 = vector.broadcast %16 : vector<1x32xf32> to vector<8x32xf32>
    %18 = arith.addf %13, %17 : vector<8x32xf32>
    %cst_9 = arith.constant 0.353553385 : f32
    %19 = vector.broadcast %cst_9 : f32 to vector<8x32xf32>
    %20 = arith.mulf %18, %19 : vector<8x32xf32>
    %c0_10 = arith.constant 0 : index
    %c0_11 = arith.constant 0 : index
    %21 = vector.load %arg13[%c0_10, %c0_11] : memref<8x32xf32, #tpu.memory_space<vmem>>, vector<8x32xf32>
    %c0_12 = arith.constant 0 : index
    %c0_13 = arith.constant 0 : index
    %22 = vector.load %arg14[%c0_12, %c0_13] : memref<8x32xbf16, #tpu.memory_space<vmem>>, vector<8x32xbf16>
    %23 = vector.extract_strided_slice %20 {offsets = [0, 0], sizes = [8, 8], strides = [1, 1]} : vector<8x32xf32> to vector<8x8xf32>
    %24 = vector.extract_strided_slice %21 {offsets = [0, 0], sizes = [8, 8], strides = [1, 1]} : vector<8x32xf32> to vector<8x8xf32>
    %cst_14 = arith.constant dense<0.000000e+00> : vector<8x8xf32>
    %25 = tpu.matmul %23, %24, %cst_14 {dimension_numbers = #tpu.dot_dimension_numbers<[1], [1], [0], [0], [0, 0, 1, 0], [], []>} : vector<8x8xf32>, vector<8x8xf32>, vector<8x8xf32> -> vector<8x8xf32>
    %26 = vector.broadcast %3 : vector<1x8xf32> to vector<8x8xf32>
    %27 = arith.addf %25, %26 : vector<8x8xf32>
    %c0_15 = arith.constant 0 : index
    %c0_16 = arith.constant 0 : index
    %c0_17 = arith.constant 0 : index
    %c0_18 = arith.constant 0 : index
    %28 = vector.load %arg12[%c0_15, %c0_16, %c0_17, %c0_18] : memref<1x4x8x8xf32, #tpu.memory_space<vmem>>, vector<1x1x8x8xf32>
    %29 = vector.shape_cast %28 : vector<1x1x8x8xf32> to vector<8x8xf32>
    %30 = vector.shape_cast %27 : vector<8x8xf32> to vector<1x1x8x8xf32>
    tpu.vector_store %arg12[%c0_15, %c0_16, %c0_17, %c0_18], %30 {strides = array<i32>} : memref<1x4x8x8xf32, #tpu.memory_space<vmem>>, vector<1x1x8x8xf32>,
    %cst_19 = arith.constant dense<0xFF800000> : vector<8xf32>
    %31 = vector.multi_reduction <maximumf>, %27, %cst_19 [1] : vector<8x8xf32> to vector<8xf32>
    %32 = vector.shape_cast %31 : vector<8xf32> to vector<8x1xf32>
    %33 = vector.broadcast %32 : vector<8x1xf32> to vector<8x8xf32>
    %34 = arith.subf %27, %33 : vector<8x8xf32>
    %35 = math.exp %34 : vector<8x8xf32>
    %cst_20 = arith.constant dense<0.000000e+00> : vector<8xf32>
    %36 = vector.multi_reduction <add>, %35, %cst_20 [1] : vector<8x8xf32> to vector<8xf32>
    %37 = vector.shape_cast %36 : vector<8xf32> to vector<8x1xf32>
    %38 = tpu.reciprocal %37 {approx = true} : vector<8x1xf32> -> vector<8x1xf32>
    %39 = vector.broadcast %38 : vector<8x1xf32> to vector<8x8xf32>
    %40 = arith.mulf %35, %39 : vector<8x8xf32>
    %41 = arith.truncf %40 : vector<8x8xf32> to vector<8x8xbf16>
    %42 = vector.extract_strided_slice %22 {offsets = [0, 0], sizes = [8, 8], strides = [1, 1]} : vector<8x32xbf16> to vector<8x8xbf16>
    %cst_21 = arith.constant dense<0.000000e+00> : vector<8x8xf32>
    %43 = tpu.matmul %41, %42, %cst_21 {dimension_numbers = #tpu.dot_dimension_numbers<[1], [0], [0], [1], [0, 0, 1, 1], [], []>} : vector<8x8xbf16>, vector<8x8xbf16>, vector<8x8xf32> -> vector<8x8xf32>
    %c0_22 = arith.constant 0 : index
    %c0_23 = arith.constant 0 : index
    %44 = vector.load %arg15[%c0_22, %c0_23] : memref<8x32xf32, #tpu.memory_space<vmem>>, vector<8x8xf32>
    tpu.vector_store %arg15[%c0_22, %c0_23], %43 {strides = array<i32>} : memref<8x32xf32, #tpu.memory_space<vmem>>, vector<8x8xf32>,
    %45 = vector.extract_strided_slice %20 {offsets = [0, 8], sizes = [8, 8], strides = [1, 1]} : vector<8x32xf32> to vector<8x8xf32>
    %46 = vector.extract_strided_slice %21 {offsets = [0, 8], sizes = [8, 8], strides = [1, 1]} : vector<8x32xf32> to vector<8x8xf32>
    %cst_24 = arith.constant dense<0.000000e+00> : vector<8x8xf32>
    %47 = tpu.matmul %45, %46, %cst_24 {dimension_numbers = #tpu.dot_dimension_numbers<[1], [1], [0], [0], [0, 0, 1, 0], [], []>} : vector<8x8xf32>, vector<8x8xf32>, vector<8x8xf32> -> vector<8x8xf32>
    %48 = vector.broadcast %3 : vector<1x8xf32> to vector<8x8xf32>
    %49 = arith.addf %47, %48 : vector<8x8xf32>
    %c0_25 = arith.constant 0 : index
    %c1 = arith.constant 1 : index
    %c0_26 = arith.constant 0 : index
    %c0_27 = arith.constant 0 : index
    %50 = vector.load %arg12[%c0_25, %c1, %c0_26, %c0_27] : memref<1x4x8x8xf32, #tpu.memory_space<vmem>>, vector<1x1x8x8xf32>
    %51 = vector.shape_cast %50 : vector<1x1x8x8xf32> to vector<8x8xf32>
    %52 = vector.shape_cast %49 : vector<8x8xf32> to vector<1x1x8x8xf32>
    tpu.vector_store %arg12[%c0_25, %c1, %c0_26, %c0_27], %52 {strides = array<i32>} : memref<1x4x8x8xf32, #tpu.memory_space<vmem>>, vector<1x1x8x8xf32>,
    %cst_28 = arith.constant dense<0xFF800000> : vector<8xf32>
    %53 = vector.multi_reduction <maximumf>, %49, %cst_28 [1] : vector<8x8xf32> to vector<8xf32>
    %54 = vector.shape_cast %53 : vector<8xf32> to vector<8x1xf32>
    %55 = vector.broadcast %54 : vector<8x1xf32> to vector<8x8xf32>
    %56 = arith.subf %49, %55 : vector<8x8xf32>
    %57 = math.exp %56 : vector<8x8xf32>
    %cst_29 = arith.constant dense<0.000000e+00> : vector<8xf32>
    %58 = vector.multi_reduction <add>, %57, %cst_29 [1] : vector<8x8xf32> to vector<8xf32>
    %59 = vector.shape_cast %58 : vector<8xf32> to vector<8x1xf32>
    %60 = tpu.reciprocal %59 {approx = true} : vector<8x1xf32> -> vector<8x1xf32>
    %61 = vector.broadcast %60 : vector<8x1xf32> to vector<8x8xf32>
    %62 = arith.mulf %57, %61 : vector<8x8xf32>
    %63 = arith.truncf %62 : vector<8x8xf32> to vector<8x8xbf16>
    %64 = vector.extract_strided_slice %22 {offsets = [0, 8], sizes = [8, 8], strides = [1, 1]} : vector<8x32xbf16> to vector<8x8xbf16>
    %cst_30 = arith.constant dense<0.000000e+00> : vector<8x8xf32>
    %65 = tpu.matmul %63, %64, %cst_30 {dimension_numbers = #tpu.dot_dimension_numbers<[1], [0], [0], [1], [0, 0, 1, 1], [], []>} : vector<8x8xbf16>, vector<8x8xbf16>, vector<8x8xf32> -> vector<8x8xf32>
    %c0_31 = arith.constant 0 : index
    %c8 = arith.constant 8 : index
    %66 = vector.load %arg15[%c0_31, %c8] : memref<8x32xf32, #tpu.memory_space<vmem>>, vector<8x8xf32>
    tpu.vector_store %arg15[%c0_31, %c8], %65 {strides = array<i32>} : memref<8x32xf32, #tpu.memory_space<vmem>>, vector<8x8xf32>,
    %67 = vector.extract_strided_slice %20 {offsets = [0, 16], sizes = [8, 8], strides = [1, 1]} : vector<8x32xf32> to vector<8x8xf32>
    %68 = vector.extract_strided_slice %21 {offsets = [0, 16], sizes = [8, 8], strides = [1, 1]} : vector<8x32xf32> to vector<8x8xf32>
    %cst_32 = arith.constant dense<0.000000e+00> : vector<8x8xf32>
    %69 = tpu.matmul %67, %68, %cst_32 {dimension_numbers = #tpu.dot_dimension_numbers<[1], [1], [0], [0], [0, 0, 1, 0], [], []>} : vector<8x8xf32>, vector<8x8xf32>, vector<8x8xf32> -> vector<8x8xf32>
    %70 = vector.broadcast %3 : vector<1x8xf32> to vector<8x8xf32>
    %71 = arith.addf %69, %70 : vector<8x8xf32>
    %c0_33 = arith.constant 0 : index
    %c2 = arith.constant 2 : index
    %c0_34 = arith.constant 0 : index
    %c0_35 = arith.constant 0 : index
    %72 = vector.load %arg12[%c0_33, %c2, %c0_34, %c0_35] : memref<1x4x8x8xf32, #tpu.memory_space<vmem>>, vector<1x1x8x8xf32>
    %73 = vector.shape_cast %72 : vector<1x1x8x8xf32> to vector<8x8xf32>
    %74 = vector.shape_cast %71 : vector<8x8xf32> to vector<1x1x8x8xf32>
    tpu.vector_store %arg12[%c0_33, %c2, %c0_34, %c0_35], %74 {strides = array<i32>} : memref<1x4x8x8xf32, #tpu.memory_space<vmem>>, vector<1x1x8x8xf32>,
    %cst_36 = arith.constant dense<0xFF800000> : vector<8xf32>
    %75 = vector.multi_reduction <maximumf>, %71, %cst_36 [1] : vector<8x8xf32> to vector<8xf32>
    %76 = vector.shape_cast %75 : vector<8xf32> to vector<8x1xf32>
    %77 = vector.broadcast %76 : vector<8x1xf32> to vector<8x8xf32>
    %78 = arith.subf %71, %77 : vector<8x8xf32>
    %79 = math.exp %78 : vector<8x8xf32>
    %cst_37 = arith.constant dense<0.000000e+00> : vector<8xf32>
    %80 = vector.multi_reduction <add>, %79, %cst_37 [1] : vector<8x8xf32> to vector<8xf32>
    %81 = vector.shape_cast %80 : vector<8xf32> to vector<8x1xf32>
    %82 = tpu.reciprocal %81 {approx = true} : vector<8x1xf32> -> vector<8x1xf32>
    %83 = vector.broadcast %82 : vector<8x1xf32> to vector<8x8xf32>
    %84 = arith.mulf %79, %83 : vector<8x8xf32>
    %85 = arith.truncf %84 : vector<8x8xf32> to vector<8x8xbf16>
    %86 = vector.extract_strided_slice %22 {offsets = [0, 16], sizes = [8, 8], strides = [1, 1]} : vector<8x32xbf16> to vector<8x8xbf16>
    %cst_38 = arith.constant dense<0.000000e+00> : vector<8x8xf32>
    %87 = tpu.matmul %85, %86, %cst_38 {dimension_numbers = #tpu.dot_dimension_numbers<[1], [0], [0], [1], [0, 0, 1, 1], [], []>} : vector<8x8xbf16>, vector<8x8xbf16>, vector<8x8xf32> -> vector<8x8xf32>
    %c0_39 = arith.constant 0 : index
    %c16 = arith.constant 16 : index
    %88 = vector.load %arg15[%c0_39, %c16] : memref<8x32xf32, #tpu.memory_space<vmem>>, vector<8x8xf32>
    tpu.vector_store %arg15[%c0_39, %c16], %87 {strides = array<i32>} : memref<8x32xf32, #tpu.memory_space<vmem>>, vector<8x8xf32>,
    %89 = vector.extract_strided_slice %20 {offsets = [0, 24], sizes = [8, 8], strides = [1, 1]} : vector<8x32xf32> to vector<8x8xf32>
    %90 = vector.extract_strided_slice %21 {offsets = [0, 24], sizes = [8, 8], strides = [1, 1]} : vector<8x32xf32> to vector<8x8xf32>
    %cst_40 = arith.constant dense<0.000000e+00> : vector<8x8xf32>
    %91 = tpu.matmul %89, %90, %cst_40 {dimension_numbers = #tpu.dot_dimension_numbers<[1], [1], [0], [0], [0, 0, 1, 0], [], []>} : vector<8x8xf32>, vector<8x8xf32>, vector<8x8xf32> -> vector<8x8xf32>
    %92 = vector.broadcast %3 : vector<1x8xf32> to vector<8x8xf32>
    %93 = arith.addf %91, %92 : vector<8x8xf32>
    %c0_41 = arith.constant 0 : index
    %c3 = arith.constant 3 : index
    %c0_42 = arith.constant 0 : index
    %c0_43 = arith.constant 0 : index
    %94 = vector.load %arg12[%c0_41, %c3, %c0_42, %c0_43] : memref<1x4x8x8xf32, #tpu.memory_space<vmem>>, vector<1x1x8x8xf32>
    %95 = vector.shape_cast %94 : vector<1x1x8x8xf32> to vector<8x8xf32>
    %96 = vector.shape_cast %93 : vector<8x8xf32> to vector<1x1x8x8xf32>
    tpu.vector_store %arg12[%c0_41, %c3, %c0_42, %c0_43], %96 {strides = array<i32>} : memref<1x4x8x8xf32, #tpu.memory_space<vmem>>, vector<1x1x8x8xf32>,
    %cst_44 = arith.constant dense<0xFF800000> : vector<8xf32>
    %97 = vector.multi_reduction <maximumf>, %93, %cst_44 [1] : vector<8x8xf32> to vector<8xf32>
    %98 = vector.shape_cast %97 : vector<8xf32> to vector<8x1xf32>
    %99 = vector.broadcast %98 : vector<8x1xf32> to vector<8x8xf32>
    %100 = arith.subf %93, %99 : vector<8x8xf32>
    %101 = math.exp %100 : vector<8x8xf32>
    %cst_45 = arith.constant dense<0.000000e+00> : vector<8xf32>
    %102 = vector.multi_reduction <add>, %101, %cst_45 [1] : vector<8x8xf32> to vector<8xf32>
    %103 = vector.shape_cast %102 : vector<8xf32> to vector<8x1xf32>
    %104 = tpu.reciprocal %103 {approx = true} : vector<8x1xf32> -> vector<8x1xf32>
    %105 = vector.broadcast %104 : vector<8x1xf32> to vector<8x8xf32>
    %106 = arith.mulf %101, %105 : vector<8x8xf32>
    %107 = arith.truncf %106 : vector<8x8xf32> to vector<8x8xbf16>
    %108 = vector.extract_strided_slice %22 {offsets = [0, 24], sizes = [8, 8], strides = [1, 1]} : vector<8x32xbf16> to vector<8x8xbf16>
    %cst_46 = arith.constant dense<0.000000e+00> : vector<8x8xf32>
    %109 = tpu.matmul %107, %108, %cst_46 {dimension_numbers = #tpu.dot_dimension_numbers<[1], [0], [0], [1], [0, 0, 1, 1], [], []>} : vector<8x8xbf16>, vector<8x8xbf16>, vector<8x8xf32> -> vector<8x8xf32>
    %c0_47 = arith.constant 0 : index
    %c24 = arith.constant 24 : index
    %110 = vector.load %arg15[%c0_47, %c24] : memref<8x32xf32, #tpu.memory_space<vmem>>, vector<8x8xf32>
    tpu.vector_store %arg15[%c0_47, %c24], %109 {strides = array<i32>} : memref<8x32xf32, #tpu.memory_space<vmem>>, vector<8x8xf32>,
    %c0_48 = arith.constant 0 : index
    %c0_49 = arith.constant 0 : index
    %111 = vector.load %arg15[%c0_48, %c0_49] : memref<8x32xf32, #tpu.memory_space<vmem>>, vector<8x32xf32>
    %c0_50 = arith.constant 0 : index
    %c0_51 = arith.constant 0 : index
    %c0_52 = arith.constant 0 : index
    %112 = vector.load %arg11[%c0_50, %c0_51, %c0_52] : memref<1x8x32xf32, #tpu.memory_space<vmem>>, vector<1x8x32xf32>
    %113 = vector.shape_cast %112 : vector<1x8x32xf32> to vector<8x32xf32>
    %114 = vector.shape_cast %111 : vector<8x32xf32> to vector<1x8x32xf32>
    tpu.vector_store %arg11[%c0_50, %c0_51, %c0_52], %114 {strides = array<i32>} : memref<1x8x32xf32, #tpu.memory_space<vmem>>, vector<1x8x32xf32>,
    return
  }
  func.func @transform_0(%arg0: i32, %arg1: i32, %arg2: i32) -> (i32, i32, i32) {
    %c0_i32 = arith.constant 0 : i32
    %c0_i32_0 = arith.constant 0 : i32
    %c0_i32_1 = arith.constant 0 : i32
    return %arg0, %c0_i32, %c0_i32_0 : i32, i32, i32
  }
  func.func @transform_1(%arg0: i32, %arg1: i32, %arg2: i32) -> (i32, i32, i32) {
    %c0_i32 = arith.constant 0 : i32
    %c0_i32_0 = arith.constant 0 : i32
    %c0_i32_1 = arith.constant 0 : i32
    %c0_i32_2 = arith.constant 0 : i32
    return %c0_i32, %c0_i32_0, %c0_i32_1 : i32, i32, i32
  }
  func.func @transform_2(%arg0: i32, %arg1: i32, %arg2: i32) -> (i32, i32, i32) {
    %c0_i32 = arith.constant 0 : i32
    %c0_i32_0 = arith.constant 0 : i32
    %c0_i32_1 = arith.constant 0 : i32
    %c0_i32_2 = arith.constant 0 : i32
    return %c0_i32, %c0_i32_0, %c0_i32_1 : i32, i32, i32
  }
  func.func @transform_3(%arg0: i32, %arg1: i32, %arg2: i32) -> (i32, i32, i32) {
    %c0_i32 = arith.constant 0 : i32
    %c0_i32_0 = arith.constant 0 : i32
    %c0_i32_1 = arith.constant 0 : i32
    %c0_i32_2 = arith.constant 0 : i32
    return %c0_i32, %c0_i32_0, %c0_i32_1 : i32, i32, i32
  }
  func.func @transform_4(%arg0: i32, %arg1: i32, %arg2: i32) -> (i32, i32, i32) {
    %c0_i32 = arith.constant 0 : i32
    %c0_i32_0 = arith.constant 0 : i32
    %c0_i32_1 = arith.constant 0 : i32
    %c0_i32_2 = arith.constant 0 : i32
    return %c0_i32, %c0_i32_0, %c0_i32_1 : i32, i32, i32
  }
  func.func @transform_5(%arg0: i32, %arg1: i32, %arg2: i32) -> (i32, i32, i32) {
    %c0_i32 = arith.constant 0 : i32
    %c0_i32_0 = arith.constant 0 : i32
    %c0_i32_1 = arith.constant 0 : i32
    %c0_i32_2 = arith.constant 0 : i32
    return %c0_i32, %c0_i32_0, %c0_i32_1 : i32, i32, i32
  }
  func.func @transform_6(%arg0: i32, %arg1: i32, %arg2: i32) -> (i32, i32, i32) {
    %c0_i32 = arith.constant 0 : i32
    %c0_i32_0 = arith.constant 0 : i32
    %c0_i32_1 = arith.constant 0 : i32
    %c0_i32_2 = arith.constant 0 : i32
    return %c0_i32, %c0_i32_0, %c0_i32_1 : i32, i32, i32
  }
  func.func @transform_7(%arg0: i32, %arg1: i32, %arg2: i32) -> (i32, i32, i32) {
    %c0_i32 = arith.constant 0 : i32
    %c0_i32_0 = arith.constant 0 : i32
    %c0_i32_1 = arith.constant 0 : i32
    return %arg0, %c0_i32, %c0_i32_0 : i32, i32, i32
  }
  func.func @transform_8(%arg0: i32, %arg1: i32, %arg2: i32) -> (i32, i32, i32) {
    %c0_i32 = arith.constant 0 : i32
    return %arg0, %arg2, %arg1 : i32, i32, i32
  }
  func.func @transform_9(%arg0: i32, %arg1: i32, %arg2: i32) -> (i32, i32, i32, i32) {
    %c0_i32 = arith.constant 0 : i32
    %c0_i32_0 = arith.constant 0 : i32
    return %arg0, %arg1, %arg2, %c0_i32 : i32, i32, i32, i32
  }
}

</mosaic_0001>

<llo_original>
// kernel: tpu_custom_call.1
$region0: #{tpu_custom_call.1}
  #allocation0 [shape = 'u32[]', space=smem, size = 0x4, offset = 0x4, fixed_abs, tag = 'smem constant byte address 0x4 - core index']
  #allocation1 [shape = 'u32[144,128]{1,0:T(1,128)}', space=vmem, size = 0x12000, scoped, tag = 'internal scratch']
  #allocation2 [shape = 'f32[8,32]{1,0:T(8,128)}', space=vmem, size = 0x1000, scoped, tag = 'scratch operand']
  #allocation3 [shape = 'bf16[8,32]{1,0:T(8,128)(2,1)}', space=vmem, size = 0x800, scoped, tag = 'scratch operand']
  #allocation4 [shape = 'f32[8,32]{1,0:T(8,128)}', space=vmem, size = 0x1000, scoped, tag = 'scratch operand']
  %s0 = inlined_call_operand.hbm [shape: f32[2,8,32], index: 0, kind: input, shape index: {}]
  %s1 = inlined_call_operand.hbm [shape: f32[1,32,32], index: 1, kind: input, shape index: {}]
  %s2 = inlined_call_operand.hbm [shape: f32[1,32,32], index: 2, kind: input, shape index: {}]
  %s3 = inlined_call_operand.hbm [shape: f32[1,32,32], index: 3, kind: input, shape index: {}]
  %s4 = inlined_call_operand.vmem [shape: f32[1,1,32], index: 4, kind: input, shape index: {}]
  %s5 = inlined_call_operand.vmem [shape: f32[1,1,32], index: 5, kind: input, shape index: {}]
  %s6 = inlined_call_operand.vmem [shape: f32[1,1,32], index: 6, kind: input, shape index: {}]
  %s7 = inlined_call_operand.vmem [shape: f32[2,1,8], index: 7, kind: input, shape index: {}]
  %s8 = inlined_call_operand.hbm [shape: f32[2,8,32], index: 8, kind: output, shape index: {0}]
  %s9 = inlined_call_operand.hbm [shape: f32[2,4,8,8], index: 9, kind: output, shape index: {1}]
  %10 = xla_tuple %s8, %s9
  %s11 = sld [smem:[#allocation0]]
  $region93: #{tpu_custom_call.1} parent=0
    _
  %s13 = ssub.s32 1, %s11
  %s14 = scalar_select 0, %s13, %s11
  $region1: #{tpu_custom_call.1} parent=0
    #allocation5 [shape = 'u8[8192]{0}', space=vmem, size = 0x2000, scoped, tag = 'input window, operand 0']
    #allocation6 [shape = 's32[2]{0}', space=sflag, size = 0x8, scoped, tag = 'scoped memory for tpu_custom_call.1']
    #allocation7 [shape = 's32[2]{0}', space=sflag, size = 0x8, scoped, tag = 'scoped memory for tpu_custom_call.1']
    #allocation8 [shape = 'u8[16384]{0}', space=vmem, size = 0x4000, scoped, tag = 'input window, operand 1, single buffered']
    #allocation9 [shape = 's32[1]{0}', space=sflag, size = 0x4, scoped, tag = 'scoped memory for tpu_custom_call.1']
    #allocation10 [shape = 'u8[16384]{0}', space=vmem, size = 0x4000, scoped, tag = 'input window, operand 2, single buffered']
    #allocation11 [shape = 'u8[16384]{0}', space=vmem, size = 0x4000, scoped, tag = 'input window, operand 3, single buffered']
    #allocation12 [shape = 's32[1]{0}', space=sflag, size = 0x4, scoped, tag = 'scoped memory for tpu_custom_call.1']
    #allocation13 [shape = 'u8[8192]{0}', space=vmem, size = 0x2000, scoped, tag = 'output window, operand 0']
    #allocation14 [shape = 'u8[32768]{0}', space=vmem, size = 0x8000, scoped, tag = 'output window, operand 1']
    #allocation15 [shape = 's32[2]{0}', space=sflag, size = 0x8, scoped, tag = 'scoped memory for tpu_custom_call.1']
    %15 = vsyncpa [#allocation6], 0
    %s16 = scalar_lea.sflag [#allocation6], 1
    %17 = vsyncpa %s16, 0
    %18 = vsyncpa [#allocation9], 0
    %19 = vsyncpa [#allocation12], 0
    %20 = vsyncpa [#allocation7], 0
    %s21 = scalar_lea.sflag [#allocation7], 1
    %22 = vsyncpa %s21, 0
    %23 = vsyncpa [#allocation15], 0
    %s24 = scalar_lea.sflag [#allocation15], 1
    %25 = vsyncpa %s24, 0
    loop: start=0, step=1, limit=4
    $region2: #{tpu_custom_call.1} parent=1 // loop_pre_header
      _
    $region3: #{tpu_custom_call.1} parent=1 // loop_header
      %s27 = sphi 0, %s31
      %p28 = scmp.ge.s32.totalorder %s27, 4
      %s34 = sphi 0, %s53
      %s35 = sphi 0, %s49
      %s36 = sphi 0, %s45
      %s37 = sphi 0, %s34
      %s38 = sphi 0, %s35
      %s39 = sphi 0, %s36
      %s40 = sphi 0, %s37
      %s41 = sphi 0, %s38
      %s42 = sphi 0, %s39
      %s56 = sphi 0, %s58
      %s59 = sphi 0, %s56
      %s60 = sphi 0, %s59
      %s76 = sphi 0, %s60
      %s80 = sphi 0, %s80
      %s82 = sphi 0, %s80
      %s83 = sphi 0, %s82
      %s97 = sphi 0, %s83
      %s101 = sphi 0, %s101
      %s103 = sphi 0, %s101
      %s104 = sphi 0, %s103
      %s118 = sphi 0, %s104
      %s122 = sphi 0, %s122
      %s124 = sphi 0, %s122
      %s125 = sphi 0, %s124
      %s139 = sphi 0, %s125
      %s143 = sphi 0, %s143
      %s145 = sphi 0, %s143
      %s146 = sphi 0, %s145
      %s160 = sphi 0, %s146
      %s164 = sphi 0, %s164
      %s166 = sphi 0, %s164
      %s167 = sphi 0, %s166
      %s181 = sphi 0, %s167
      %s185 = sphi 0, %s185
      %s187 = sphi 0, %s185
      %s188 = sphi 0, %s187
      %s202 = sphi 0, %s188
      %s208 = sphi 0, %s210
      %s211 = sphi 0, %s208
      %s212 = sphi 0, %s211
      %s228 = sphi 0, %s212
      %s238 = sphi 0, %s240
      %s241 = sphi 0, %s238
      %s242 = sphi 0, %s241
      %s258 = sphi 0, %s242
      %s268 = sphi 0, %s270
      %s271 = sphi 0, %s268
      %s272 = sphi 0, %s271
      %s288 = sphi 0, %s272
    $region4: #{tpu_custom_call.1} parent=1 // loop_header_branch
      %30 = sbr.rel (%p28) target = $region8
    $region5: #{tpu_custom_call.1} parent=1 // loop_body
      %s32 = ssub.s32 %s27, 1
      %s33 = ssub.s32 %s27, 2
      %s43 = sadd.s32 1, %s36
      %p44 = scmp.ge.s32.totalorder %s43, 1
      %s45 = scalar_select %p44, 0, %s43
      %s46 = sadd.s32 1, %s35
      %s47 = scalar_select %p44, %s46, %s35
      %p48 = scmp.ge.s32.totalorder %s47, 1
      %s49 = scalar_select %p48, 0, %s47
      %s50 = sadd.s32 1, %s34
      %s51 = scalar_select %p48, %s50, %s34
      %p52 = scmp.ge.s32.totalorder %s51, 2
      %s53 = scalar_select %p52, 0, %s51
      %s54 = ssub.s32 %s34, %s53
      %p55 = scmp.eq.s32.totalorder %s54, 0
      %s57 = sadd.s32 %s56, 1
      %s58 = scalar_select %p55, %s56, %s57
      %p61 = pneg %p55
      %p62 = scmp.eq.s32.totalorder %s27, 1
      %p63 = por %p61, %p62
      %p64 = scmp.ne.s32.totalorder %s56, %s59
      %p65 = scmp.eq.s32.totalorder %s27, 0
      %p66 = por %p64, %p65
      %p67 = scmp.ne.s32.totalorder %s56, %s59
      %p68 = scmp.eq.s32.totalorder %s32, 1
      %p69 = por %p67, %p68
      %p70 = scmp.ne.s32.totalorder %s59, %s60
      %p71 = scmp.eq.s32.totalorder %s32, 0
      %p72 = por %p70, %p71
      %p73 = scmp.ne.s32.totalorder %s59, %s60
      %p74 = scmp.eq.s32.totalorder %s33, 1
      %p75 = por %p73, %p74
      %p77 = scmp.ne.s32.totalorder %s60, %s76
      %p78 = scmp.eq.s32.totalorder %s33, 0
      %p79 = por %p77, %p78
      %s81 = sadd.s32 %s80, 1
      %p84 = scmp.eq.s32.totalorder %s27, 1
      %p85 = scmp.ne.s32.totalorder %s80, %s82
      %p86 = scmp.eq.s32.totalorder %s27, 0
      %p87 = por %p85, %p86
      %p88 = scmp.ne.s32.totalorder %s80, %s82
      %p89 = scmp.eq.s32.totalorder %s32, 1
      %p90 = por %p88, %p89
      %p91 = scmp.ne.s32.totalorder %s82, %s83
      %p92 = scmp.eq.s32.totalorder %s32, 0
      %p93 = por %p91, %p92
      %p94 = scmp.ne.s32.totalorder %s82, %s83
      %p95 = scmp.eq.s32.totalorder %s33, 1
      %p96 = por %p94, %p95
      %p98 = scmp.ne.s32.totalorder %s83, %s97
      %p99 = scmp.eq.s32.totalorder %s33, 0
      %p100 = por %p98, %p99
      %s102 = sadd.s32 %s101, 1
      %p105 = scmp.eq.s32.totalorder %s27, 1
      %p106 = scmp.ne.s32.totalorder %s101, %s103
      %p107 = scmp.eq.s32.totalorder %s27, 0
      %p108 = por %p106, %p107
      %p109 = scmp.ne.s32.totalorder %s101, %s103
      %p110 = scmp.eq.s32.totalorder %s32, 1
      %p111 = por %p109, %p110
      %p112 = scmp.ne.s32.totalorder %s103, %s104
      %p113 = scmp.eq.s32.totalorder %s32, 0
      %p114 = por %p112, %p113
      %p115 = scmp.ne.s32.totalorder %s103, %s104
      %p116 = scmp.eq.s32.totalorder %s33, 1
      %p117 = por %p115, %p116
      %p119 = scmp.ne.s32.totalorder %s104, %s118
      %p120 = scmp.eq.s32.totalorder %s33, 0
      %p121 = por %p119, %p120
      %s123 = sadd.s32 %s122, 1
      %p126 = scmp.eq.s32.totalorder %s27, 1
      %p127 = scmp.ne.s32.totalorder %s122, %s124
      %p128 = scmp.eq.s32.totalorder %s27, 0
      %p129 = por %p127, %p128
      %p130 = scmp.ne.s32.totalorder %s122, %s124
      %p131 = scmp.eq.s32.totalorder %s32, 1
      %p132 = por %p130, %p131
      %p133 = scmp.ne.s32.totalorder %s124, %s125
      %p134 = scmp.eq.s32.totalorder %s32, 0
      %p135 = por %p133, %p134
      %p136 = scmp.ne.s32.totalorder %s124, %s125
      %p137 = scmp.eq.s32.totalorder %s33, 1
      %p138 = por %p136, %p137
      %p140 = scmp.ne.s32.totalorder %s125, %s139
      %p141 = scmp.eq.s32.totalorder %s33, 0
      %p142 = por %p140, %p141
      %s144 = sadd.s32 %s143, 1
      %p147 = scmp.eq.s32.totalorder %s27, 1
      %p148 = scmp.ne.s32.totalorder %s143, %s145
      %p149 = scmp.eq.s32.totalorder %s27, 0
      %p150 = por %p148, %p149
      %p151 = scmp.ne.s32.totalorder %s143, %s145
      %p152 = scmp.eq.s32.totalorder %s32, 1
      %p153 = por %p151, %p152
      %p154 = scmp.ne.s32.totalorder %s145, %s146
      %p155 = scmp.eq.s32.totalorder %s32, 0
      %p156 = por %p154, %p155
      %p157 = scmp.ne.s32.totalorder %s145, %s146
      %p158 = scmp.eq.s32.totalorder %s33, 1
      %p159 = por %p157, %p158
      %p161 = scmp.ne.s32.totalorder %s146, %s160
      %p162 = scmp.eq.s32.totalorder %s33, 0
      %p163 = por %p161, %p162
      %s165 = sadd.s32 %s164, 1
      %p168 = scmp.eq.s32.totalorder %s27, 1
      %p169 = scmp.ne.s32.totalorder %s164, %s166
      %p170 = scmp.eq.s32.totalorder %s27, 0
      %p171 = por %p169, %p170
      %p172 = scmp.ne.s32.totalorder %s164, %s166
      %p173 = scmp.eq.s32.totalorder %s32, 1
      %p174 = por %p172, %p173
      %p175 = scmp.ne.s32.totalorder %s166, %s167
      %p176 = scmp.eq.s32.totalorder %s32, 0
      %p177 = por %p175, %p176
      %p178 = scmp.ne.s32.totalorder %s166, %s167
      %p179 = scmp.eq.s32.totalorder %s33, 1
      %p180 = por %p178, %p179
      %p182 = scmp.ne.s32.totalorder %s167, %s181
      %p183 = scmp.eq.s32.totalorder %s33, 0
      %p184 = por %p182, %p183
      %s186 = sadd.s32 %s185, 1
      %p189 = scmp.eq.s32.totalorder %s27, 1
      %p190 = scmp.ne.s32.totalorder %s185, %s187
      %p191 = scmp.eq.s32.totalorder %s27, 0
      %p192 = por %p190, %p191
      %p193 = scmp.ne.s32.totalorder %s185, %s187
      %p194 = scmp.eq.s32.totalorder %s32, 1
      %p195 = por %p193, %p194
      %p196 = scmp.ne.s32.totalorder %s187, %s188
      %p197 = scmp.eq.s32.totalorder %s32, 0
      %p198 = por %p196, %p197
      %p199 = scmp.ne.s32.totalorder %s187, %s188
      %p200 = scmp.eq.s32.totalorder %s33, 1
      %p201 = por %p199, %p200
      %p203 = scmp.ne.s32.totalorder %s188, %s202
      %p204 = scmp.eq.s32.totalorder %s33, 0
      %p205 = por %p203, %p204
      %s206 = ssub.s32 %s34, %s53
      %p207 = scmp.eq.s32.totalorder %s206, 0
      %s209 = sadd.s32 %s208, 1
      %s210 = scalar_select %p207, %s208, %s209
      %p213 = pneg %p207
      %p214 = scmp.eq.s32.totalorder %s27, 1
      %p215 = por %p213, %p214
      %p216 = scmp.ne.s32.totalorder %s208, %s211
      %p217 = scmp.eq.s32.totalorder %s27, 0
      %p218 = por %p216, %p217
      %p219 = scmp.ne.s32.totalorder %s208, %s211
      %p220 = scmp.eq.s32.totalorder %s32, 1
      %p221 = por %p219, %p220
      %p222 = scmp.ne.s32.totalorder %s211, %s212
      %p223 = scmp.eq.s32.totalorder %s32, 0
      %p224 = por %p222, %p223
      %p225 = scmp.ne.s32.totalorder %s211, %s212
      %p226 = scmp.eq.s32.totalorder %s33, 1
      %p227 = por %p225, %p226
      %p229 = scmp.ne.s32.totalorder %s212, %s228
      %p230 = scmp.eq.s32.totalorder %s33, 0
      %p231 = por %p229, %p230
      %s232 = ssub.s32 %s34, %s53
      %s233 = ssub.s32 %s36, %s45
      %s234 = sor.u32 %s232, %s233
      %s235 = ssub.s32 %s35, %s49
      %s236 = sor.u32 %s234, %s235
      %p237 = scmp.eq.s32.totalorder %s236, 0
      %s239 = sadd.s32 %s238, 1
      %s240 = scalar_select %p237, %s238, %s239
      %p243 = pneg %p237
      %p244 = scmp.eq.s32.totalorder %s27, 1
      %p245 = por %p243, %p244
      %p246 = scmp.ne.s32.totalorder %s238, %s241
      %p247 = scmp.eq.s32.totalorder %s27, 0
      %p248 = por %p246, %p247
      %p249 = scmp.ne.s32.totalorder %s238, %s241
      %p250 = scmp.eq.s32.totalorder %s32, 1
      %p251 = por %p249, %p250
      %p252 = scmp.ne.s32.totalorder %s241, %s242
      %p253 = scmp.eq.s32.totalorder %s32, 0
      %p254 = por %p252, %p253
      %p255 = scmp.ne.s32.totalorder %s241, %s242
      %p256 = scmp.eq.s32.totalorder %s33, 1
      %p257 = por %p255, %p256
      %p259 = scmp.ne.s32.totalorder %s242, %s258
      %p260 = scmp.eq.s32.totalorder %s33, 0
      %p261 = por %p259, %p260
      %s262 = ssub.s32 %s34, %s53
      %s263 = ssub.s32 %s35, %s49
      %s264 = sor.u32 %s262, %s263
      %s265 = ssub.s32 %s36, %s45
      %s266 = sor.u32 %s264, %s265
      %p267 = scmp.eq.s32.totalorder %s266, 0
      %s269 = sadd.s32 %s268, 1
      %s270 = scalar_select %p267, %s268, %s269
      %p273 = pneg %p267
      %p274 = scmp.eq.s32.totalorder %s27, 1
      %p275 = por %p273, %p274
      %p276 = scmp.ne.s32.totalorder %s268, %s271
      %p277 = scmp.eq.s32.totalorder %s27, 0
      %p278 = por %p276, %p277
      %p279 = scmp.ne.s32.totalorder %s268, %s271
      %p280 = scmp.eq.s32.totalorder %s32, 1
      %p281 = por %p279, %p280
      %p282 = scmp.ne.s32.totalorder %s271, %s272
      %p283 = scmp.eq.s32.totalorder %s32, 0
      %p284 = por %p282, %p283
      %p285 = scmp.ne.s32.totalorder %s271, %s272
      %p286 = scmp.eq.s32.totalorder %s33, 1
      %p287 = por %p285, %p286
      %p289 = scmp.ne.s32.totalorder %s272, %s288
      %p290 = scmp.eq.s32.totalorder %s33, 0
      %p291 = por %p289, %p290
      %p292 = scmp.le.s32.totalorder 1, %s27
      %p293 = scmp.lt.s32.totalorder %s27, 3
      %p294 = pnand %p292, %p293
      %p295 = pneg %p294
      // Predicated region
      $region9: #{tpu_custom_call.1} parent=5 // pred_check
        _
      $region10: #{tpu_custom_call.1} parent=5 // pred_check_branch
        %297 = sbr.rel (%p294) target = $region12
      $region11: #{tpu_custom_call.1} parent=5 // pred_region
        %s298 = ssub.s32 %s27, 1
        // Predicated region
        $region13: #{tpu_custom_call.1} parent=11 // pred_check
          %p299 = pneg %p93
        $region14: #{tpu_custom_call.1} parent=11 // pred_check_branch
          %301 = sbr.rel (%p299) target = $region16
        $region15: #{tpu_custom_call.1} parent=11 // pred_region
          %s303 = ssub.s32 512, 512
          %304 = vsyncadd [#allocation9], %s303
          %s305 = sshll.u32 [#allocation8], 4
          %s306 = int_to_ptr.vmem [resolvable:$true] %s305
          %311 = dma.hbm_to_vmem [thread:$0]  %s1, 512, %s306, [#allocation9], 128, 128, 8
        $region16: #{tpu_custom_call.1} parent=11 // pred_fallthru
          _
        // Predicated region
        $region17: #{tpu_custom_call.1} parent=11 // pred_check
          %p312 = pneg %p114
        $region18: #{tpu_custom_call.1} parent=11 // pred_check_branch
          %314 = sbr.rel (%p312) target = $region20
        $region19: #{tpu_custom_call.1} parent=11 // pred_region
          %s316 = ssub.s32 512, 512
          %317 = vsyncadd [#allocation9], %s316
          %s318 = sshll.u32 [#allocation10], 4
          %s319 = int_to_ptr.vmem [resolvable:$true] %s318
          %324 = dma.hbm_to_vmem [thread:$0]  %s2, 512, %s319, [#allocation9], 128, 128, 8
        $region20: #{tpu_custom_call.1} parent=11 // pred_fallthru
          _
        // Predicated region
        $region21: #{tpu_custom_call.1} parent=11 // pred_check
          %p325 = pneg %p135
        $region22: #{tpu_custom_call.1} parent=11 // pred_check_branch
          %327 = sbr.rel (%p325) target = $region24
        $region23: #{tpu_custom_call.1} parent=11 // pred_region
          %s329 = ssub.s32 512, 512
          %330 = vsyncadd [#allocation12], %s329
          %s331 = sshll.u32 [#allocation11], 4
          %s332 = int_to_ptr.vmem [resolvable:$true] %s331
          %337 = dma.hbm_to_vmem [thread:$0]  %s3, 512, %s332, [#allocation12], 128, 128, 8
        $region24: #{tpu_custom_call.1} parent=11 // pred_fallthru
          _
        // Predicated region
        $region25: #{tpu_custom_call.1} parent=11 // pred_check
          %p338 = pneg %p156
        $region26: #{tpu_custom_call.1} parent=11 // pred_check_branch
          %340 = sbr.rel (%p338) target = $region28
        $region27: #{tpu_custom_call.1} parent=11 // pred_region
          _
        $region28: #{tpu_custom_call.1} parent=11 // pred_fallthru
          _
        // Predicated region
        $region29: #{tpu_custom_call.1} parent=11 // pred_check
          %p341 = pneg %p177
        $region30: #{tpu_custom_call.1} parent=11 // pred_check_branch
          %343 = sbr.rel (%p341) target = $region32
        $region31: #{tpu_custom_call.1} parent=11 // pred_region
          _
        $region32: #{tpu_custom_call.1} parent=11 // pred_fallthru
          _
        // Predicated region
        $region33: #{tpu_custom_call.1} parent=11 // pred_check
          %p344 = pneg %p198
        $region34: #{tpu_custom_call.1} parent=11 // pred_check_branch
          %346 = sbr.rel (%p344) target = $region36
        $region35: #{tpu_custom_call.1} parent=11 // pred_region
          _
        $region36: #{tpu_custom_call.1} parent=11 // pred_fallthru
          _
      $region12: #{tpu_custom_call.1} parent=5 // pred_fallthru
        _
      %p347 = scmp.lt.s32.totalorder %s27, 2
      // Predicated region
      $region37: #{tpu_custom_call.1} parent=5 // pred_check
        %p348 = pneg %p347
      $region38: #{tpu_custom_call.1} parent=5 // pred_check_branch
        %350 = sbr.rel (%p348) target = $region40
      $region39: #{tpu_custom_call.1} parent=5 // pred_region
        // Predicated region
        $region41: #{tpu_custom_call.1} parent=39 // pred_check
          %p351 = pneg %p66
        $region42: #{tpu_custom_call.1} parent=39 // pred_check_branch
          %353 = sbr.rel (%p351) target = $region44
        $region43: #{tpu_custom_call.1} parent=39 // pred_region
          %s354 = sand.u32 %s56, 1
          %s355 = scalar_lea.sflag [#allocation6], %s354
          %s356 = sand.u32 %s56, 1
          %s357 = smul.addr %s356, 8
          %s358 = scalar_lea.vmem [#allocation5], %s357
          %s360 = ssub.s32 128, 128
          %361 = vsyncadd %s355, %s360
          %s362 = smul.addr %s34, 128
          %s363 = scalar_lea.hbm %s0, %s362
          %s365 = sshll.u32 %s358, 4
          %s366 = int_to_ptr.vmem [resolvable:$true] %s365
          %368 = dma.hbm_to_vmem [thread:$0]  %s363, 128, %s366, %s355
        $region44: #{tpu_custom_call.1} parent=39 // pred_fallthru
          _
        // Predicated region
        $region45: #{tpu_custom_call.1} parent=39 // pred_check
          %p369 = pneg %p218
        $region46: #{tpu_custom_call.1} parent=39 // pred_check_branch
          %371 = sbr.rel (%p369) target = $region48
        $region47: #{tpu_custom_call.1} parent=39 // pred_region
          %p372 = scmp.lt.s32.totalorder %s34, 1
          %s373 = scalar_select %p372, %s34, 1
          %s374 = scalar_lea.vmem %s7, %s373
        $region48: #{tpu_custom_call.1} parent=39 // pred_fallthru
          _
      $region40: #{tpu_custom_call.1} parent=5 // pred_fallthru
        _
      %p375 = scmp.le.s32.totalorder 1, %s27
      %p376 = scmp.lt.s32.totalorder %s27, 3
      %p377 = pnand %p375, %p376
      %p378 = pneg %p377
      // Predicated region
      $region49: #{tpu_custom_call.1} parent=5 // pred_check
        _
      $region50: #{tpu_custom_call.1} parent=5 // pred_check_branch
        %380 = sbr.rel (%p377) target = $region52
      $region51: #{tpu_custom_call.1} parent=5 // pred_region
        %s381 = ssub.s32 %s27, 1
        %s382 = sand.u32 %s59, 1
        %s383 = scalar_lea.sflag [#allocation6], %s382
        %s384 = sand.u32 %s59, 1
        %s385 = smul.addr %s384, 8
        %s386 = scalar_lea.vmem [#allocation5], %s385
        // Predicated region
        $region53: #{tpu_custom_call.1} parent=51 // pred_check
          %p387 = pneg %p72
        $region54: #{tpu_custom_call.1} parent=51 // pred_check_branch
          %389 = sbr.rel (%p387) target = $region56
        $region55: #{tpu_custom_call.1} parent=51 // pred_region
          %390 = dma.done %s383, 128
        $region56: #{tpu_custom_call.1} parent=51 // pred_fallthru
          _
        // Predicated region
        $region57: #{tpu_custom_call.1} parent=51 // pred_check
          %p391 = pneg %p93
        $region58: #{tpu_custom_call.1} parent=51 // pred_check_branch
          %393 = sbr.rel (%p391) target = $region60
        $region59: #{tpu_custom_call.1} parent=51 // pred_region
          %394 = dma.done [#allocation9], 512
        $region60: #{tpu_custom_call.1} parent=51 // pred_fallthru
          _
        // Predicated region
        $region61: #{tpu_custom_call.1} parent=51 // pred_check
          %p395 = pneg %p114
        $region62: #{tpu_custom_call.1} parent=51 // pred_check_branch
          %397 = sbr.rel (%p395) target = $region64
        $region63: #{tpu_custom_call.1} parent=51 // pred_region
          %398 = dma.done [#allocation9], 512
        $region64: #{tpu_custom_call.1} parent=51 // pred_fallthru
          _
        // Predicated region
        $region65: #{tpu_custom_call.1} parent=51 // pred_check
          %p399 = pneg %p135
        $region66: #{tpu_custom_call.1} parent=51 // pred_check_branch
          %401 = sbr.rel (%p399) target = $region68
        $region67: #{tpu_custom_call.1} parent=51 // pred_region
          %402 = dma.done [#allocation12], 512
        $region68: #{tpu_custom_call.1} parent=51 // pred_fallthru
          _
        %s403 = sand.u32 %s59, 1
        %s404 = scalar_lea.sflag [#allocation6], %s403
        %s405 = sand.u32 %s59, 1
        %s406 = smul.addr %s405, 8
        %s407 = scalar_lea.vmem [#allocation5], %s406
        %p408 = pneg %p72
        %p409 = pneg %p69
        %p410 = pneg %p93
        %p411 = pneg %p90
        %p412 = pneg %p114
        %p413 = pneg %p111
        %p414 = pneg %p135
        %p415 = pneg %p132
        %p416 = pneg %p156
        %p417 = pneg %p153
        %p418 = pneg %p177
        %p419 = pneg %p174
        %p420 = pneg %p198
        %p421 = pneg %p195
        %p422 = scmp.lt.s32.totalorder %s37, 1
        %s423 = scalar_select %p422, %s37, 1
        %s424 = scalar_lea.vmem %s7, %s423
        %p425 = pneg %p224
        %p426 = pneg %p221
        %p427 = pneg %p254
        %p428 = pneg %p251
        %s429 = sand.u32 %s241, 1
        %s430 = scalar_lea.sflag [#allocation7], %s429
        %s431 = sand.u32 %s241, 1
        %s432 = smul.addr %s431, 8
        %s433 = scalar_lea.vmem [#allocation13], %s432
        %p434 = pneg %p284
        %p435 = pneg %p281
        %s436 = sand.u32 %s271, 1
        %s437 = scalar_lea.sflag [#allocation15], %s436
        %s438 = sand.u32 %s271, 1
        %s439 = smul.addr %s438, 32
        %s440 = scalar_lea.vmem [#allocation14], %s439
        %p441 = scmp.lt.s32.totalorder %s37, 1
        %s442 = scalar_select %p441, %s37, 1
        %s443 = scalar_lea.vmem %s7, %s442
        %s444 = smul.u32 4, %s38
        %s446 = smul.u32 %s39, 8
        %v447 = vld [vmem:[%s443] sm:$0x1]
        %p448 = scmp.eq.s32.totalorder %s39, 0
        // Predicated region
        $region69: #{tpu_custom_call.1} parent=51 // pred_check
          %p449 = pneg %p448
        $region70: #{tpu_custom_call.1} parent=51 // pred_check_branch
          %451 = sbr.rel (%p449) target = $region72
        $region71: #{tpu_custom_call.1} parent=51 // pred_region
          %v452 = vld [vmem:[%s386] sm:$0xff]
          %s453 = smul.u32 %s38, 32
          %s454 = scalar_lea.vmem [#allocation10], %s453
          %v455 = vld [vmem:[%s454] sm:$0xff]
          %v456 = vld [vmem:[%s454 + $0x8] sm:$0xff]
          %v457 = vld [vmem:[%s454 + $0x10] sm:$0xff]
          %v458 = vld [vmem:[%s454 + $0x18] sm:$0xff]
          %s459 = scalar_lea.vmem %s5, %s38
          %v460 = vld [vmem:[%s459] sm:$0x1]
          %v462 = vlaneseq
          %v463 = vshrl.u32 %v462, 7
          %v464 = vsub.s32 0, %v463
          %v465 = vrot.slane %v460, %v464
          %vm467 = vcmask 261120
          %v469 = vsel %vm467, %v452, 0
          %471 = vmatprep.subr.mxu0 0.0
          %472 = vmatpush1.msra.mxu0 %v455
          %473 = vmatprep.subr.mxu0 0.0
          %474 = vmatpush1.msra.mxu0 %v456
          %475 = vmatprep.subr.mxu0 0.0
          %476 = vmatpush1.msra.mxu0 %v457
          %477 = vmatprep.subr.mxu0 0.0
          %478 = vmatpush1.msra.mxu0 %v458
          %479 = vmatprep.subr.mxu0 0.0
          %480 = vmatpush1.msra.mxu0 0.0
          %481 = vmatprep.subr.mxu0 0.0
          %482 = vmatpush1.msra.mxu0 0.0
          %483 = vmatprep.subr.mxu0 0.0
          %484 = vmatpush1.msra.mxu0 0.0
          %485 = vmatprep.subr.mxu0 0.0
          %486 = vmatpush1.msra.mxu0 0.0
          %487 = vmatprep.subr.mxu0 0.0
          %488 = vmatpush1.msra.mxu0 0.0
          %489 = vmatprep.subr.mxu0 0.0
          %490 = vmatpush1.msra.mxu0 0.0
          %491 = vmatprep.subr.mxu0 0.0
          %492 = vmatpush1.msra.mxu0 0.0
          %493 = vmatprep.subr.mxu0 0.0
          %494 = vmatpush1.msra.mxu0 0.0
          %495 = vmatprep.subr.mxu0 0.0
          %496 = vmatpush1.msra.mxu0 0.0
          %497 = vmatprep.subr.mxu0 0.0
          %498 = vmatpush1.msra.mxu0 0.0
          %499 = vmatprep.subr.mxu0 0.0
          %500 = vmatpush1.msra.mxu0 0.0
          %501 = vmatprep.subr.mxu0 0.0
          %502 = vmatpush1.msra.mxu0 0.0
          %503 = vmatprep.subr.mxu0 0.0
          %504 = vmatpush1.msra.mxu0 0.0
          %505 = vmatprep.subr.mxu0 0.0
          %506 = vmatpush1.msra.mxu0 0.0
          %507 = vmatprep.subr.mxu0 0.0
          %508 = vmatpush1.msra.mxu0 0.0
          %509 = vmatprep.subr.mxu0 0.0
          %510 = vmatpush1.msra.mxu0 0.0
          %511 = vmatprep.subr.mxu0 0.0
          %512 = vmatpush1.msra.mxu0 0.0
          %513 = vmatprep.subr.mxu0 0.0
          %514 = vmatpush1.msra.mxu0 0.0
          %515 = vmatprep.subr.mxu0 0.0
          %516 = vmatpush1.msra.mxu0 0.0
          %517 = vmatprep.subr.mxu0 0.0
          %518 = vmatpush1.msra.mxu0 0.0
          %519 = vmatprep.subr.mxu0 0.0
          %520 = vmatpush1.msra.mxu0 0.0
          %521 = vmatprep.subr.mxu0 0.0
          %522 = vmatpush1.msra.mxu0 0.0
          %523 = vmatprep.subr.mxu0 0.0
          %524 = vmatpush1.msra.mxu0 0.0
          %525 = vmatprep.subr.mxu0 0.0
          %526 = vmatpush1.msra.mxu0 0.0
          %527 = vmatprep.subr.mxu0 0.0
          %528 = vmatpush1.msra.mxu0 0.0
          %529 = vmatprep.subr.mxu0 0.0
          %530 = vmatpush1.msra.mxu0 0.0
          %531 = vmatprep.subr.mxu0 0.0
          %532 = vmatpush1.msra.mxu0 0.0
          %533 = vmatprep.subr.mxu0 0.0
          %534 = vmatpush1.msra.mxu0 0.0
          %535 = vmatprep.mubr.f32.mxu0 0.0
          %536 = vmatmul.mubr.f32.gmra.mrb[0].mxu0 %v469
          %v537 = vpop.f32.mrb[0].mxu0
          %v538 = vadd.f32 %v465, %v537
          %v539 = vpop.f32.mrb[0].mxu0
          %540 = vdwg.mxu0
          %541 = vst.msk [vmem:[#allocation2] sm:$0xff] %vm467, %v538
          %v542 = vpack.c.bf16 %v452, %v452
          %s543 = scalar_lea.vmem [#allocation11], %s453
          %v544 = vld [vmem:[%s543] sm:$0xff]
          %v545 = vld [vmem:[%s543 + $0x8] sm:$0xff]
          %v546 = vld [vmem:[%s543 + $0x10] sm:$0xff]
          %v547 = vld [vmem:[%s543 + $0x18] sm:$0xff]
          %v548 = vpack.c.bf16 %v545, %v544
          %v549 = vpack.c.bf16 %v547, %v546
          %s550 = scalar_lea.vmem %s6, %s38
          %v551 = vld [vmem:[%s550] sm:$0x1]
          %v553 = vlaneseq
          %v554 = vshrl.u32 %v553, 7
          %v555 = vsub.s32 0, %v554
          %v556 = vrot.slane %v551, %v555
          %v559 = vsel %vm467, %v542, 0
          %561 = vmatprep.subr.bf16.mxu0 0
          %562 = vmatpush1.bf16.msra.mxu0 %v548
          %563 = vmatprep.subr.bf16.mxu0 0
          %564 = vmatpush1.bf16.msra.mxu0 %v549
          %565 = vmatprep.subr.bf16.mxu0 0
          %566 = vmatpush1.bf16.msra.mxu0 0
          %567 = vmatprep.subr.bf16.mxu0 0
          %568 = vmatpush1.bf16.msra.mxu0 0
          %569 = vmatprep.subr.bf16.mxu0 0
          %570 = vmatpush1.bf16.msra.mxu0 0
          %571 = vmatprep.subr.bf16.mxu0 0
          %572 = vmatpush1.bf16.msra.mxu0 0
          %573 = vmatprep.subr.bf16.mxu0 0
          %574 = vmatpush1.bf16.msra.mxu0 0
          %575 = vmatprep.subr.bf16.mxu0 0
          %576 = vmatpush1.bf16.msra.mxu0 0
          %577 = vmatprep.subr.bf16.mxu0 0
          %578 = vmatpush1.bf16.msra.mxu0 0
          %579 = vmatprep.subr.bf16.mxu0 0
          %580 = vmatpush1.bf16.msra.mxu0 0
          %581 = vmatprep.subr.bf16.mxu0 0
          %582 = vmatpush1.bf16.msra.mxu0 0
          %583 = vmatprep.subr.bf16.mxu0 0
          %584 = vmatpush1.bf16.msra.mxu0 0
          %585 = vmatprep.subr.bf16.mxu0 0
          %586 = vmatpush1.bf16.msra.mxu0 0
          %587 = vmatprep.subr.bf16.mxu0 0
          %588 = vmatpush1.bf16.msra.mxu0 0
          %589 = vmatprep.subr.bf16.mxu0 0
          %590 = vmatpush1.bf16.msra.mxu0 0
          %591 = vmatprep.subr.bf16.mxu0 0
          %592 = vmatpush1.bf16.msra.mxu0 0
          %593 = vmatprep.mubr.bf16.mxu0 0
          %594 = vmatmul.mubr.bf16.gmra.mrb[0].mxu0 %v559
          %v595 = vpop.f32.mrb[0].mxu0
          %v596 = vadd.f32 %v556, %v595
          %v597 = vpop.f32.mrb[0].mxu0
          %v598 = vpop.f32.mrb[0].mxu0
          %v599 = vpop.f32.mrb[0].mxu0
          %600 = vdwg.mxu0
          %v601 = vpack.c.bf16 %v596, %v596
          %vm602 = vcmask 257024
          %603 = vst.msk [vmem:[#allocation3] sm:$0xf] %vm602, %v601
        $region72: #{tpu_custom_call.1} parent=51 // pred_fallthru
          _
        %s604 = scalar_lea.vmem %s386, %s446 [#allocation5]
        %v605 = vld [vmem:[%s604] sm:$0xff]
        %s606 = smul.u32 %s38, 32
        %s607 = scalar_lea.vmem [#allocation8], %s606
        %v608 = vld [vmem:[%s607] sm:$0xff]
        %v609 = vld [vmem:[%s607 + $0x8] sm:$0xff]
        %v610 = vld [vmem:[%s607 + $0x10] sm:$0xff]
        %v611 = vld [vmem:[%s607 + $0x18] sm:$0xff]
        %s612 = scalar_lea.vmem %s4, %s38
        %v613 = vld [vmem:[%s612] sm:$0x1]
        %v615 = vlaneseq
        %v616 = vshrl.u32 %v615, 7
        %v617 = vsub.s32 0, %v616
        %v618 = vrot.slane %v613, %v617
        %vm620 = vcmask 261120
        %v622 = vsel %vm620, %v605, 0
        %624 = vmatprep.subr.mxu0 0.0
        %625 = vmatpush1.msra.mxu0 %v608
        %626 = vmatprep.subr.mxu0 0.0
        %627 = vmatpush1.msra.mxu0 %v609
        %628 = vmatprep.subr.mxu0 0.0
        %629 = vmatpush1.msra.mxu0 %v610
        %630 = vmatprep.subr.mxu0 0.0
        %631 = vmatpush1.msra.mxu0 %v611
        %632 = vmatprep.subr.mxu0 0.0
        %633 = vmatpush1.msra.mxu0 0.0
        %634 = vmatprep.subr.mxu0 0.0
        %635 = vmatpush1.msra.mxu0 0.0
        %636 = vmatprep.subr.mxu0 0.0
        %637 = vmatpush1.msra.mxu0 0.0
        %638 = vmatprep.subr.mxu0 0.0
        %639 = vmatpush1.msra.mxu0 0.0
        %640 = vmatprep.subr.mxu0 0.0
        %641 = vmatpush1.msra.mxu0 0.0
        %642 = vmatprep.subr.mxu0 0.0
        %643 = vmatpush1.msra.mxu0 0.0
        %644 = vmatprep.subr.mxu0 0.0
        %645 = vmatpush1.msra.mxu0 0.0
        %646 = vmatprep.subr.mxu0 0.0
        %647 = vmatpush1.msra.mxu0 0.0
        %648 = vmatprep.subr.mxu0 0.0
        %649 = vmatpush1.msra.mxu0 0.0
        %650 = vmatprep.subr.mxu0 0.0
        %651 = vmatpush1.msra.mxu0 0.0
        %652 = vmatprep.subr.mxu0 0.0
        %653 = vmatpush1.msra.mxu0 0.0
        %654 = vmatprep.subr.mxu0 0.0
        %655 = vmatpush1.msra.mxu0 0.0
        %656 = vmatprep.subr.mxu0 0.0
        %657 = vmatpush1.msra.mxu0 0.0
        %658 = vmatprep.subr.mxu0 0.0
        %659 = vmatpush1.msra.mxu0 0.0
        %660 = vmatprep.subr.mxu0 0.0
        %661 = vmatpush1.msra.mxu0 0.0
        %662 = vmatprep.subr.mxu0 0.0
        %663 = vmatpush1.msra.mxu0 0.0
        %664 = vmatprep.subr.mxu0 0.0
        %665 = vmatpush1.msra.mxu0 0.0
        %666 = vmatprep.subr.mxu0 0.0
        %667 = vmatpush1.msra.mxu0 0.0
        %668 = vmatprep.subr.mxu0 0.0
        %669 = vmatpush1.msra.mxu0 0.0
        %670 = vmatprep.subr.mxu0 0.0
        %671 = vmatpush1.msra.mxu0 0.0
        %672 = vmatprep.subr.mxu0 0.0
        %673 = vmatpush1.msra.mxu0 0.0
        %674 = vmatprep.subr.mxu0 0.0
        %675 = vmatpush1.msra.mxu0 0.0
        %676 = vmatprep.subr.mxu0 0.0
        %677 = vmatpush1.msra.mxu0 0.0
        %678 = vmatprep.subr.mxu0 0.0
        %679 = vmatpush1.msra.mxu0 0.0
        %680 = vmatprep.subr.mxu0 0.0
        %681 = vmatpush1.msra.mxu0 0.0
        %682 = vmatprep.subr.mxu0 0.0
        %683 = vmatpush1.msra.mxu0 0.0
        %684 = vmatprep.subr.mxu0 0.0
        %685 = vmatpush1.msra.mxu0 0.0
        %686 = vmatprep.subr.mxu0 0.0
        %687 = vmatpush1.msra.mxu0 0.0
        %688 = vmatprep.mubr.f32.mxu0 0.0
        %689 = vmatmul.mubr.f32.gmra.mrb[0].mxu0 %v622
        %v690 = vpop.f32.mrb[0].mxu0
        %v691 = vadd.f32 %v618, %v690
        %v692 = vpop.f32.mrb[0].mxu0
        %693 = vdwg.mxu0
        %v694 = vmul.f32 %v691, 0.35355338
        %v695 = vld [vmem:[#allocation2] sm:$0xff]
        %v696 = vld [vmem:[#allocation3] sm:$0xf]
        %v698 = vlaneseq
        %v699 = vshrl.u32 %v698, 7
        %v700 = vsub.s32 0, %v699
        %v701 = vrot.slane %v447, %v700
        %vm703 = vcmask 64512
        %v705 = vsel %vm703, %v694, 0
        %v708 = vsel %vm703, %v695, 0
        %710 = vmatprep.subr.mxu0 0.0
        %711 = vmatpush1.xpose.msra.mxu0 %v708
        %712 = vmatprep.subr.mxu0 0.0
        %713 = vmatpush1.xpose.msra.mxu0 0.0
        %714 = vmatprep.subr.mxu0 0.0
        %715 = vmatpush1.xpose.msra.mxu0 0.0
        %716 = vmatprep.subr.mxu0 0.0
        %717 = vmatpush1.xpose.msra.mxu0 0.0
        %718 = vmatprep.subr.mxu0 0.0
        %719 = vmatpush1.xpose.msra.mxu0 0.0
        %720 = vmatprep.subr.mxu0 0.0
        %721 = vmatpush1.xpose.msra.mxu0 0.0
        %722 = vmatprep.subr.mxu0 0.0
        %723 = vmatpush1.xpose.msra.mxu0 0.0
        %724 = vmatprep.subr.mxu0 0.0
        %725 = vmatpush1.xpose.msra.mxu0 0.0
        %726 = vmatprep.subr.mxu0 0.0
        %727 = vmatpush1.xpose.msra.mxu0 0.0
        %728 = vmatprep.subr.mxu0 0.0
        %729 = vmatpush1.xpose.msra.mxu0 0.0
        %730 = vmatprep.subr.mxu0 0.0
        %731 = vmatpush1.xpose.msra.mxu0 0.0
        %732 = vmatprep.subr.mxu0 0.0
        %733 = vmatpush1.xpose.msra.mxu0 0.0
        %734 = vmatprep.subr.mxu0 0.0
        %735 = vmatpush1.xpose.msra.mxu0 0.0
        %736 = vmatprep.subr.mxu0 0.0
        %737 = vmatpush1.xpose.msra.mxu0 0.0
        %738 = vmatprep.subr.mxu0 0.0
        %739 = vmatpush1.xpose.msra.mxu0 0.0
        %740 = vmatprep.subr.mxu0 0.0
        %741 = vmatpush1.xpose.msra.mxu0 0.0
        %742 = vmatprep.subr.mxu0 0.0
        %743 = vmatpush1.xpose.msra.mxu0 0.0
        %744 = vmatprep.subr.mxu0 0.0
        %745 = vmatpush1.xpose.msra.mxu0 0.0
        %746 = vmatprep.subr.mxu0 0.0
        %747 = vmatpush1.xpose.msra.mxu0 0.0
        %748 = vmatprep.subr.mxu0 0.0
        %749 = vmatpush1.xpose.msra.mxu0 0.0
        %750 = vmatprep.subr.mxu0 0.0
        %751 = vmatpush1.xpose.msra.mxu0 0.0
        %752 = vmatprep.subr.mxu0 0.0
        %753 = vmatpush1.xpose.msra.mxu0 0.0
        %754 = vmatprep.subr.mxu0 0.0
        %755 = vmatpush1.xpose.msra.mxu0 0.0
        %756 = vmatprep.subr.mxu0 0.0
        %757 = vmatpush1.xpose.msra.mxu0 0.0
        %758 = vmatprep.subr.mxu0 0.0
        %759 = vmatpush1.xpose.msra.mxu0 0.0
        %760 = vmatprep.subr.mxu0 0.0
        %761 = vmatpush1.xpose.msra.mxu0 0.0
        %762 = vmatprep.subr.mxu0 0.0
        %763 = vmatpush1.xpose.msra.mxu0 0.0
        %764 = vmatprep.subr.mxu0 0.0
        %765 = vmatpush1.xpose.msra.mxu0 0.0
        %766 = vmatprep.subr.mxu0 0.0
        %767 = vmatpush1.xpose.msra.mxu0 0.0
        %768 = vmatprep.subr.mxu0 0.0
        %769 = vmatpush1.xpose.msra.mxu0 0.0
        %770 = vmatprep.subr.mxu0 0.0
        %771 = vmatpush1.xpose.msra.mxu0 0.0
        %772 = vmatprep.subr.mxu0 0.0
        %773 = vmatpush1.xpose.msra.mxu0 0.0
        %774 = vmatprep.mubr.f32.mxu0 0.0
        %775 = vmatmul.mubr.f32.gmra.mrb[0].mxu0 %v705
        %v776 = vpop.f32.mrb[0].mxu0
        %v777 = vadd.f32 %v701, %v776
        %v778 = vpop.f32.mrb[0].mxu0
        %779 = vdwg.mxu0
        %780 = vst.msk [vmem:[%s440] sm:$0xff] %vm703, %v777
        %v781 = vsel %vm703, %v777, -inf
        %782 = vmax.xlane.f32.xlu0 %v781
        %v783 = vpop.xlane.xlu0 %782
        %v784 = vsub.f32 %v777, %v783
        %v785 = vmul.f32 %v784, 1.442695
        %v786 = vpow.pop %v785
        %v787 = vsel %vm703, %v786, 0.0
        %788 = vadd.xlane.f32.xlu0 %v787
        %v789 = vpop.xlane.xlu0 %788
        %v790 = vrcp.pop %v789
        %v791 = vmul.f32 %v786, %v790
        %v792 = vpack.c.bf16 %v791, %v791
        %v794 = vsel %vm703, %v792, 0
        %vm796 = vcmask 1043456
        %v798 = vsel %vm796, %v696, 0
        %800 = vmatprep.subr.bf16.mxu0 0
        %801 = vmatpush1.bf16.msra.mxu0 %v798
        %802 = vmatprep.subr.bf16.mxu0 0
        %803 = vmatpush1.bf16.msra.mxu0 0
        %804 = vmatprep.subr.bf16.mxu0 0
        %805 = vmatpush1.bf16.msra.mxu0 0
        %806 = vmatprep.subr.bf16.mxu0 0
        %807 = vmatpush1.bf16.msra.mxu0 0
        %808 = vmatprep.subr.bf16.mxu0 0
        %809 = vmatpush1.bf16.msra.mxu0 0
        %810 = vmatprep.subr.bf16.mxu0 0
        %811 = vmatpush1.bf16.msra.mxu0 0
        %812 = vmatprep.subr.bf16.mxu0 0
        %813 = vmatpush1.bf16.msra.mxu0 0
        %814 = vmatprep.subr.bf16.mxu0 0
        %815 = vmatpush1.bf16.msra.mxu0 0
        %816 = vmatprep.subr.bf16.mxu0 0
        %817 = vmatpush1.bf16.msra.mxu0 0
        %818 = vmatprep.subr.bf16.mxu0 0
        %819 = vmatpush1.bf16.msra.mxu0 0
        %820 = vmatprep.subr.bf16.mxu0 0
        %821 = vmatpush1.bf16.msra.mxu0 0
        %822 = vmatprep.subr.bf16.mxu0 0
        %823 = vmatpush1.bf16.msra.mxu0 0
        %824 = vmatprep.subr.bf16.mxu0 0
        %825 = vmatpush1.bf16.msra.mxu0 0
        %826 = vmatprep.subr.bf16.mxu0 0
        %827 = vmatpush1.bf16.msra.mxu0 0
        %828 = vmatprep.subr.bf16.mxu0 0
        %829 = vmatpush1.bf16.msra.mxu0 0
        %830 = vmatprep.subr.bf16.mxu0 0
        %831 = vmatpush1.bf16.msra.mxu0 0
        %832 = vmatprep.mubr.bf16.mxu0 0
        %833 = vmatmul.mubr.bf16.gmra.mrb[0].mxu0 %v794
        %v834 = vpop.f32.mrb[0].mxu0
        %v835 = vadd.f32 0.0, %v834
        %v836 = vpop.f32.mrb[0].mxu0
        %v837 = vpop.f32.mrb[0].mxu0
        %v838 = vpop.f32.mrb[0].mxu0
        %839 = vdwg.mxu0
        %840 = vst.msk [vmem:[#allocation4] sm:$0xff] %vm703, %v835
        %841 = vrot.lane.b32.xlu0 %v694, 120
        %v842 = vpop.permute.xlu0 %841
        %843 = vrot.lane.b32.xlu0 %v695, 120
        %v844 = vpop.permute.xlu0 %843
        %v845 = vsel %vm703, %v842, 0
        %v847 = vsel %vm703, %v844, 0
        %849 = vmatprep.subr.mxu0 0.0
        %850 = vmatpush1.xpose.msra.mxu0 %v847
        %851 = vmatprep.subr.mxu0 0.0
        %852 = vmatpush1.xpose.msra.mxu0 0.0
        %853 = vmatprep.subr.mxu0 0.0
        %854 = vmatpush1.xpose.msra.mxu0 0.0
        %855 = vmatprep.subr.mxu0 0.0
        %856 = vmatpush1.xpose.msra.mxu0 0.0
        %857 = vmatprep.subr.mxu0 0.0
        %858 = vmatpush1.xpose.msra.mxu0 0.0
        %859 = vmatprep.subr.mxu0 0.0
        %860 = vmatpush1.xpose.msra.mxu0 0.0
        %861 = vmatprep.subr.mxu0 0.0
        %862 = vmatpush1.xpose.msra.mxu0 0.0
        %863 = vmatprep.subr.mxu0 0.0
        %864 = vmatpush1.xpose.msra.mxu0 0.0
        %865 = vmatprep.subr.mxu0 0.0
        %866 = vmatpush1.xpose.msra.mxu0 0.0
        %867 = vmatprep.subr.mxu0 0.0
        %868 = vmatpush1.xpose.msra.mxu0 0.0
        %869 = vmatprep.subr.mxu0 0.0
        %870 = vmatpush1.xpose.msra.mxu0 0.0
        %871 = vmatprep.subr.mxu0 0.0
        %872 = vmatpush1.xpose.msra.mxu0 0.0
        %873 = vmatprep.subr.mxu0 0.0
        %874 = vmatpush1.xpose.msra.mxu0 0.0
        %875 = vmatprep.subr.mxu0 0.0
        %876 = vmatpush1.xpose.msra.mxu0 0.0
        %877 = vmatprep.subr.mxu0 0.0
        %878 = vmatpush1.xpose.msra.mxu0 0.0
        %879 = vmatprep.subr.mxu0 0.0
        %880 = vmatpush1.xpose.msra.mxu0 0.0
        %881 = vmatprep.subr.mxu0 0.0
        %882 = vmatpush1.xpose.msra.mxu0 0.0
        %883 = vmatprep.subr.mxu0 0.0
        %884 = vmatpush1.xpose.msra.mxu0 0.0
        %885 = vmatprep.subr.mxu0 0.0
        %886 = vmatpush1.xpose.msra.mxu0 0.0
        %887 = vmatprep.subr.mxu0 0.0
        %888 = vmatpush1.xpose.msra.mxu0 0.0
        %889 = vmatprep.subr.mxu0 0.0
        %890 = vmatpush1.xpose.msra.mxu0 0.0
        %891 = vmatprep.subr.mxu0 0.0
        %892 = vmatpush1.xpose.msra.mxu0 0.0
        %893 = vmatprep.subr.mxu0 0.0
        %894 = vmatpush1.xpose.msra.mxu0 0.0
        %895 = vmatprep.subr.mxu0 0.0
        %896 = vmatpush1.xpose.msra.mxu0 0.0
        %897 = vmatprep.subr.mxu0 0.0
        %898 = vmatpush1.xpose.msra.mxu0 0.0
        %899 = vmatprep.subr.mxu0 0.0
        %900 = vmatpush1.xpose.msra.mxu0 0.0
        %901 = vmatprep.subr.mxu0 0.0
        %902 = vmatpush1.xpose.msra.mxu0 0.0
        %903 = vmatprep.subr.mxu0 0.0
        %904 = vmatpush1.xpose.msra.mxu0 0.0
        %905 = vmatprep.subr.mxu0 0.0
        %906 = vmatpush1.xpose.msra.mxu0 0.0
        %907 = vmatprep.subr.mxu0 0.0
        %908 = vmatpush1.xpose.msra.mxu0 0.0
        %909 = vmatprep.subr.mxu0 0.0
        %910 = vmatpush1.xpose.msra.mxu0 0.0
        %911 = vmatprep.subr.mxu0 0.0
        %912 = vmatpush1.xpose.msra.mxu0 0.0
        %913 = vmatprep.mubr.f32.mxu0 0.0
        %914 = vmatmul.mubr.f32.gmra.mrb[0].mxu0 %v845
        %v915 = vpop.f32.mrb[0].mxu0
        %v916 = vadd.f32 %v701, %v915
        %v917 = vpop.f32.mrb[0].mxu0
        %918 = vdwg.mxu0
        %s919 = scalar_lea.vmem %s440, 8 [#allocation14]
        %920 = vst.msk [vmem:[%s919] sm:$0xff] %vm703, %v916
        %v921 = vsel %vm703, %v916, -inf
        %922 = vmax.xlane.f32.xlu0 %v921
        %v923 = vpop.xlane.xlu0 %922
        %v924 = vsub.f32 %v916, %v923
        %v925 = vmul.f32 %v924, 1.442695
        %v926 = vpow.pop %v925
        %v927 = vsel %vm703, %v926, 0.0
        %928 = vadd.xlane.f32.xlu0 %v927
        %v929 = vpop.xlane.xlu0 %928
        %v930 = vrcp.pop %v929
        %v931 = vmul.f32 %v926, %v930
        %v932 = vpack.c.bf16 %v931, %v931
        %v934 = vunpack.c.l.b16 %v696
        %v935 = vpack.c.b16 %v934, %v934
        %936 = vrot.lane.b32.xlu0 %v935, 120
        %v937 = vpop.permute.xlu0 %936
        %v939 = vsel %vm703, %v932, 0
        %v942 = vsel %vm796, %v937, 0
        %944 = vmatprep.subr.bf16.mxu0 0
        %945 = vmatpush1.bf16.msra.mxu0 %v942
        %946 = vmatprep.subr.bf16.mxu0 0
        %947 = vmatpush1.bf16.msra.mxu0 0
        %948 = vmatprep.subr.bf16.mxu0 0
        %949 = vmatpush1.bf16.msra.mxu0 0
        %950 = vmatprep.subr.bf16.mxu0 0
        %951 = vmatpush1.bf16.msra.mxu0 0
        %952 = vmatprep.subr.bf16.mxu0 0
        %953 = vmatpush1.bf16.msra.mxu0 0
        %954 = vmatprep.subr.bf16.mxu0 0
        %955 = vmatpush1.bf16.msra.mxu0 0
        %956 = vmatprep.subr.bf16.mxu0 0
        %957 = vmatpush1.bf16.msra.mxu0 0
        %958 = vmatprep.subr.bf16.mxu0 0
        %959 = vmatpush1.bf16.msra.mxu0 0
        %960 = vmatprep.subr.bf16.mxu0 0
        %961 = vmatpush1.bf16.msra.mxu0 0
        %962 = vmatprep.subr.bf16.mxu0 0
        %963 = vmatpush1.bf16.msra.mxu0 0
        %964 = vmatprep.subr.bf16.mxu0 0
        %965 = vmatpush1.bf16.msra.mxu0 0
        %966 = vmatprep.subr.bf16.mxu0 0
        %967 = vmatpush1.bf16.msra.mxu0 0
        %968 = vmatprep.subr.bf16.mxu0 0
        %969 = vmatpush1.bf16.msra.mxu0 0
        %970 = vmatprep.subr.bf16.mxu0 0
        %971 = vmatpush1.bf16.msra.mxu0 0
        %972 = vmatprep.subr.bf16.mxu0 0
        %973 = vmatpush1.bf16.msra.mxu0 0
        %974 = vmatprep.subr.bf16.mxu0 0
        %975 = vmatpush1.bf16.msra.mxu0 0
        %976 = vmatprep.mubr.bf16.mxu0 0
        %977 = vmatmul.mubr.bf16.gmra.mrb[0].mxu0 %v939
        %v978 = vpop.f32.mrb[0].mxu0
        %v979 = vadd.f32 0.0, %v978
        %v980 = vpop.f32.mrb[0].mxu0
        %v981 = vpop.f32.mrb[0].mxu0
        %v982 = vpop.f32.mrb[0].mxu0
        %983 = vdwg.mxu0
        %985 = vrot.lane.b32.xlu0 %v979, 8
        %v986 = vpop.permute.xlu0 %985
        %vm988 = vcmask 130112
        %989 = vst.msk [vmem:[#allocation4] sm:$0xff] %vm988, %v986
        %990 = vrot.lane.b32.xlu0 %v694, 112
        %v991 = vpop.permute.xlu0 %990
        %992 = vrot.lane.b32.xlu0 %v695, 112
        %v993 = vpop.permute.xlu0 %992
        %v994 = vsel %vm703, %v991, 0
        %v996 = vsel %vm703, %v993, 0
        %998 = vmatprep.subr.mxu0 0.0
        %999 = vmatpush1.xpose.msra.mxu0 %v996
        %1000 = vmatprep.subr.mxu0 0.0
        %1001 = vmatpush1.xpose.msra.mxu0 0.0
        %1002 = vmatprep.subr.mxu0 0.0
        %1003 = vmatpush1.xpose.msra.mxu0 0.0
        %1004 = vmatprep.subr.mxu0 0.0
        %1005 = vmatpush1.xpose.msra.mxu0 0.0
        %1006 = vmatprep.subr.mxu0 0.0
        %1007 = vmatpush1.xpose.msra.mxu0 0.0
        %1008 = vmatprep.subr.mxu0 0.0
        %1009 = vmatpush1.xpose.msra.mxu0 0.0
        %1010 = vmatprep.subr.mxu0 0.0
        %1011 = vmatpush1.xpose.msra.mxu0 0.0
        %1012 = vmatprep.subr.mxu0 0.0
        %1013 = vmatpush1.xpose.msra.mxu0 0.0
        %1014 = vmatprep.subr.mxu0 0.0
        %1015 = vmatpush1.xpose.msra.mxu0 0.0
        %1016 = vmatprep.subr.mxu0 0.0
        %1017 = vmatpush1.xpose.msra.mxu0 0.0
        %1018 = vmatprep.subr.mxu0 0.0
        %1019 = vmatpush1.xpose.msra.mxu0 0.0
        %1020 = vmatprep.subr.mxu0 0.0
        %1021 = vmatpush1.xpose.msra.mxu0 0.0
        %1022 = vmatprep.subr.mxu0 0.0
        %1023 = vmatpush1.xpose.msra.mxu0 0.0
        %1024 = vmatprep.subr.mxu0 0.0
        %1025 = vmatpush1.xpose.msra.mxu0 0.0
        %1026 = vmatprep.subr.mxu0 0.0
        %1027 = vmatpush1.xpose.msra.mxu0 0.0
        %1028 = vmatprep.subr.mxu0 0.0
        %1029 = vmatpush1.xpose.msra.mxu0 0.0
        %1030 = vmatprep.subr.mxu0 0.0
        %1031 = vmatpush1.xpose.msra.mxu0 0.0
        %1032 = vmatprep.subr.mxu0 0.0
        %1033 = vmatpush1.xpose.msra.mxu0 0.0
        %1034 = vmatprep.subr.mxu0 0.0
        %1035 = vmatpush1.xpose.msra.mxu0 0.0
        %1036 = vmatprep.subr.mxu0 0.0
        %1037 = vmatpush1.xpose.msra.mxu0 0.0
        %1038 = vmatprep.subr.mxu0 0.0
        %1039 = vmatpush1.xpose.msra.mxu0 0.0
        %1040 = vmatprep.subr.mxu0 0.0
        %1041 = vmatpush1.xpose.msra.mxu0 0.0
        %1042 = vmatprep.subr.mxu0 0.0
        %1043 = vmatpush1.xpose.msra.mxu0 0.0
        %1044 = vmatprep.subr.mxu0 0.0
        %1045 = vmatpush1.xpose.msra.mxu0 0.0
        %1046 = vmatprep.subr.mxu0 0.0
        %1047 = vmatpush1.xpose.msra.mxu0 0.0
        %1048 = vmatprep.subr.mxu0 0.0
        %1049 = vmatpush1.xpose.msra.mxu0 0.0
        %1050 = vmatprep.subr.mxu0 0.0
        %1051 = vmatpush1.xpose.msra.mxu0 0.0
        %1052 = vmatprep.subr.mxu0 0.0
        %1053 = vmatpush1.xpose.msra.mxu0 0.0
        %1054 = vmatprep.subr.mxu0 0.0
        %1055 = vmatpush1.xpose.msra.mxu0 0.0
        %1056 = vmatprep.subr.mxu0 0.0
        %1057 = vmatpush1.xpose.msra.mxu0 0.0
        %1058 = vmatprep.subr.mxu0 0.0
        %1059 = vmatpush1.xpose.msra.mxu0 0.0
        %1060 = vmatprep.subr.mxu0 0.0
        %1061 = vmatpush1.xpose.msra.mxu0 0.0
        %1062 = vmatprep.mubr.f32.mxu0 0.0
        %1063 = vmatmul.mubr.f32.gmra.mrb[0].mxu0 %v994
        %v1064 = vpop.f32.mrb[0].mxu0
        %v1065 = vadd.f32 %v701, %v1064
        %v1066 = vpop.f32.mrb[0].mxu0
        %1067 = vdwg.mxu0
        %s1068 = scalar_lea.vmem %s440, 16 [#allocation14]
        %1069 = vst.msk [vmem:[%s1068] sm:$0xff] %vm703, %v1065
        %v1070 = vsel %vm703, %v1065, -inf
        %1071 = vmax.xlane.f32.xlu0 %v1070
        %v1072 = vpop.xlane.xlu0 %1071
        %v1073 = vsub.f32 %v1065, %v1072
        %v1074 = vmul.f32 %v1073, 1.442695
        %v1075 = vpow.pop %v1074
        %v1076 = vsel %vm703, %v1075, 0.0
        %1077 = vadd.xlane.f32.xlu0 %v1076
        %v1078 = vpop.xlane.xlu0 %1077
        %v1079 = vrcp.pop %v1078
        %v1080 = vmul.f32 %v1075, %v1079
        %v1081 = vpack.c.bf16 %v1080, %v1080
        %1082 = vrot.lane.b32.xlu0 %v935, 112
        %v1083 = vpop.permute.xlu0 %1082
        %v1085 = vsel %vm703, %v1081, 0
        %v1088 = vsel %vm796, %v1083, 0
        %1090 = vmatprep.subr.bf16.mxu0 0
        %1091 = vmatpush1.bf16.msra.mxu0 %v1088
        %1092 = vmatprep.subr.bf16.mxu0 0
        %1093 = vmatpush1.bf16.msra.mxu0 0
        %1094 = vmatprep.subr.bf16.mxu0 0
        %1095 = vmatpush1.bf16.msra.mxu0 0
        %1096 = vmatprep.subr.bf16.mxu0 0
        %1097 = vmatpush1.bf16.msra.mxu0 0
        %1098 = vmatprep.subr.bf16.mxu0 0
        %1099 = vmatpush1.bf16.msra.mxu0 0
        %1100 = vmatprep.subr.bf16.mxu0 0
        %1101 = vmatpush1.bf16.msra.mxu0 0
        %1102 = vmatprep.subr.bf16.mxu0 0
        %1103 = vmatpush1.bf16.msra.mxu0 0
        %1104 = vmatprep.subr.bf16.mxu0 0
        %1105 = vmatpush1.bf16.msra.mxu0 0
        %1106 = vmatprep.subr.bf16.mxu0 0
        %1107 = vmatpush1.bf16.msra.mxu0 0
        %1108 = vmatprep.subr.bf16.mxu0 0
        %1109 = vmatpush1.bf16.msra.mxu0 0
        %1110 = vmatprep.subr.bf16.mxu0 0
        %1111 = vmatpush1.bf16.msra.mxu0 0
        %1112 = vmatprep.subr.bf16.mxu0 0
        %1113 = vmatpush1.bf16.msra.mxu0 0
        %1114 = vmatprep.subr.bf16.mxu0 0
        %1115 = vmatpush1.bf16.msra.mxu0 0
        %1116 = vmatprep.subr.bf16.mxu0 0
        %1117 = vmatpush1.bf16.msra.mxu0 0
        %1118 = vmatprep.subr.bf16.mxu0 0
        %1119 = vmatpush1.bf16.msra.mxu0 0
        %1120 = vmatprep.subr.bf16.mxu0 0
        %1121 = vmatpush1.bf16.msra.mxu0 0
        %1122 = vmatprep.mubr.bf16.mxu0 0
        %1123 = vmatmul.mubr.bf16.gmra.mrb[0].mxu0 %v1085
        %v1124 = vpop.f32.mrb[0].mxu0
        %v1125 = vadd.f32 0.0, %v1124
        %v1126 = vpop.f32.mrb[0].mxu0
        %v1127 = vpop.f32.mrb[0].mxu0
        %v1128 = vpop.f32.mrb[0].mxu0
        %1129 = vdwg.mxu0
        %1131 = vrot.lane.b32.xlu0 %v1125, 16
        %v1132 = vpop.permute.xlu0 %1131
        %vm1134 = vcmask 195712
        %1135 = vst.msk [vmem:[#allocation4] sm:$0xff] %vm1134, %v1132
        %1136 = vrot.lane.b32.xlu0 %v694, 104
        %v1137 = vpop.permute.xlu0 %1136
        %1138 = vrot.lane.b32.xlu0 %v695, 104
        %v1139 = vpop.permute.xlu0 %1138
        %v1140 = vsel %vm703, %v1137, 0
        %v1142 = vsel %vm703, %v1139, 0
        %1144 = vmatprep.subr.mxu0 0.0
        %1145 = vmatpush1.xpose.msra.mxu0 %v1142
        %1146 = vmatprep.subr.mxu0 0.0
        %1147 = vmatpush1.xpose.msra.mxu0 0.0
        %1148 = vmatprep.subr.mxu0 0.0
        %1149 = vmatpush1.xpose.msra.mxu0 0.0
        %1150 = vmatprep.subr.mxu0 0.0
        %1151 = vmatpush1.xpose.msra.mxu0 0.0
        %1152 = vmatprep.subr.mxu0 0.0
        %1153 = vmatpush1.xpose.msra.mxu0 0.0
        %1154 = vmatprep.subr.mxu0 0.0
        %1155 = vmatpush1.xpose.msra.mxu0 0.0
        %1156 = vmatprep.subr.mxu0 0.0
        %1157 = vmatpush1.xpose.msra.mxu0 0.0
        %1158 = vmatprep.subr.mxu0 0.0
        %1159 = vmatpush1.xpose.msra.mxu0 0.0
        %1160 = vmatprep.subr.mxu0 0.0
        %1161 = vmatpush1.xpose.msra.mxu0 0.0
        %1162 = vmatprep.subr.mxu0 0.0
        %1163 = vmatpush1.xpose.msra.mxu0 0.0
        %1164 = vmatprep.subr.mxu0 0.0
        %1165 = vmatpush1.xpose.msra.mxu0 0.0
        %1166 = vmatprep.subr.mxu0 0.0
        %1167 = vmatpush1.xpose.msra.mxu0 0.0
        %1168 = vmatprep.subr.mxu0 0.0
        %1169 = vmatpush1.xpose.msra.mxu0 0.0
        %1170 = vmatprep.subr.mxu0 0.0
        %1171 = vmatpush1.xpose.msra.mxu0 0.0
        %1172 = vmatprep.subr.mxu0 0.0
        %1173 = vmatpush1.xpose.msra.mxu0 0.0
        %1174 = vmatprep.subr.mxu0 0.0
        %1175 = vmatpush1.xpose.msra.mxu0 0.0
        %1176 = vmatprep.subr.mxu0 0.0
        %1177 = vmatpush1.xpose.msra.mxu0 0.0
        %1178 = vmatprep.subr.mxu0 0.0
        %1179 = vmatpush1.xpose.msra.mxu0 0.0
        %1180 = vmatprep.subr.mxu0 0.0
        %1181 = vmatpush1.xpose.msra.mxu0 0.0
        %1182 = vmatprep.subr.mxu0 0.0
        %1183 = vmatpush1.xpose.msra.mxu0 0.0
        %1184 = vmatprep.subr.mxu0 0.0
        %1185 = vmatpush1.xpose.msra.mxu0 0.0
        %1186 = vmatprep.subr.mxu0 0.0
        %1187 = vmatpush1.xpose.msra.mxu0 0.0
        %1188 = vmatprep.subr.mxu0 0.0
        %1189 = vmatpush1.xpose.msra.mxu0 0.0
        %1190 = vmatprep.subr.mxu0 0.0
        %1191 = vmatpush1.xpose.msra.mxu0 0.0
        %1192 = vmatprep.subr.mxu0 0.0
        %1193 = vmatpush1.xpose.msra.mxu0 0.0
        %1194 = vmatprep.subr.mxu0 0.0
        %1195 = vmatpush1.xpose.msra.mxu0 0.0
        %1196 = vmatprep.subr.mxu0 0.0
        %1197 = vmatpush1.xpose.msra.mxu0 0.0
        %1198 = vmatprep.subr.mxu0 0.0
        %1199 = vmatpush1.xpose.msra.mxu0 0.0
        %1200 = vmatprep.subr.mxu0 0.0
        %1201 = vmatpush1.xpose.msra.mxu0 0.0
        %1202 = vmatprep.subr.mxu0 0.0
        %1203 = vmatpush1.xpose.msra.mxu0 0.0
        %1204 = vmatprep.subr.mxu0 0.0
        %1205 = vmatpush1.xpose.msra.mxu0 0.0
        %1206 = vmatprep.subr.mxu0 0.0
        %1207 = vmatpush1.xpose.msra.mxu0 0.0
        %1208 = vmatprep.mubr.f32.mxu0 0.0
        %1209 = vmatmul.mubr.f32.gmra.mrb[0].mxu0 %v1140
        %v1210 = vpop.f32.mrb[0].mxu0
        %v1211 = vadd.f32 %v701, %v1210
        %v1212 = vpop.f32.mrb[0].mxu0
        %1213 = vdwg.mxu0
        %s1214 = scalar_lea.vmem %s440, 24 [#allocation14]
        %1215 = vst.msk [vmem:[%s1214] sm:$0xff] %vm703, %v1211
        %v1216 = vsel %vm703, %v1211, -inf
        %1217 = vmax.xlane.f32.xlu0 %v1216
        %v1218 = vpop.xlane.xlu0 %1217
        %v1219 = vsub.f32 %v1211, %v1218
        %v1220 = vmul.f32 %v1219, 1.442695
        %v1221 = vpow.pop %v1220
        %v1222 = vsel %vm703, %v1221, 0.0
        %1223 = vadd.xlane.f32.xlu0 %v1222
        %v1224 = vpop.xlane.xlu0 %1223
        %v1225 = vrcp.pop %v1224
        %v1226 = vmul.f32 %v1221, %v1225
        %v1227 = vpack.c.bf16 %v1226, %v1226
        %1228 = vrot.lane.b32.xlu0 %v935, 104
        %v1229 = vpop.permute.xlu0 %1228
        %v1231 = vsel %vm703, %v1227, 0
        %v1234 = vsel %vm796, %v1229, 0
        %1236 = vmatprep.subr.bf16.mxu0 0
        %1237 = vmatpush1.bf16.msra.mxu0 %v1234
        %1238 = vmatprep.subr.bf16.mxu0 0
        %1239 = vmatpush1.bf16.msra.mxu0 0
        %1240 = vmatprep.subr.bf16.mxu0 0
        %1241 = vmatpush1.bf16.msra.mxu0 0
        %1242 = vmatprep.subr.bf16.mxu0 0
        %1243 = vmatpush1.bf16.msra.mxu0 0
        %1244 = vmatprep.subr.bf16.mxu0 0
        %1245 = vmatpush1.bf16.msra.mxu0 0
        %1246 = vmatprep.subr.bf16.mxu0 0
        %1247 = vmatpush1.bf16.msra.mxu0 0
        %1248 = vmatprep.subr.bf16.mxu0 0
        %1249 = vmatpush1.bf16.msra.mxu0 0
        %1250 = vmatprep.subr.bf16.mxu0 0
        %1251 = vmatpush1.bf16.msra.mxu0 0
        %1252 = vmatprep.subr.bf16.mxu0 0
        %1253 = vmatpush1.bf16.msra.mxu0 0
        %1254 = vmatprep.subr.bf16.mxu0 0
        %1255 = vmatpush1.bf16.msra.mxu0 0
        %1256 = vmatprep.subr.bf16.mxu0 0
        %1257 = vmatpush1.bf16.msra.mxu0 0
        %1258 = vmatprep.subr.bf16.mxu0 0
        %1259 = vmatpush1.bf16.msra.mxu0 0
        %1260 = vmatprep.subr.bf16.mxu0 0
        %1261 = vmatpush1.bf16.msra.mxu0 0
        %1262 = vmatprep.subr.bf16.mxu0 0
        %1263 = vmatpush1.bf16.msra.mxu0 0
        %1264 = vmatprep.subr.bf16.mxu0 0
        %1265 = vmatpush1.bf16.msra.mxu0 0
        %1266 = vmatprep.subr.bf16.mxu0 0
        %1267 = vmatpush1.bf16.msra.mxu0 0
        %1268 = vmatprep.mubr.bf16.mxu0 0
        %1269 = vmatmul.mubr.bf16.gmra.mrb[0].mxu0 %v1231
        %v1270 = vpop.f32.mrb[0].mxu0
        %v1271 = vadd.f32 0.0, %v1270
        %v1272 = vpop.f32.mrb[0].mxu0
        %v1273 = vpop.f32.mrb[0].mxu0
        %v1274 = vpop.f32.mrb[0].mxu0
        %1275 = vdwg.mxu0
        %1277 = vrot.lane.b32.xlu0 %v1271, 24
        %v1278 = vpop.permute.xlu0 %1277
        %vm1280 = vcmask 261312
        %1281 = vst.msk [vmem:[#allocation4] sm:$0xff] %vm1280, %v1278
        %v1282 = vld [vmem:[#allocation4] sm:$0xff]
        %1283 = vst.msk [vmem:[%s433] sm:$0xff] %vm620, %v1282
        %s1284 = sand.u32 %s241, 1
        %s1285 = scalar_lea.sflag [#allocation7], %s1284
        %s1286 = sand.u32 %s241, 1
        %s1287 = smul.addr %s1286, 8
        %s1288 = scalar_lea.vmem [#allocation13], %s1287
        %s1289 = sand.u32 %s271, 1
        %s1290 = scalar_lea.sflag [#allocation15], %s1289
        %s1291 = sand.u32 %s271, 1
        %s1292 = smul.addr %s1291, 32
        %s1293 = scalar_lea.vmem [#allocation14], %s1292
        // Predicated region
        $region73: #{tpu_custom_call.1} parent=51 // pred_check
          %p1294 = pneg %p251
        $region74: #{tpu_custom_call.1} parent=51 // pred_check_branch
          %1296 = sbr.rel (%p1294) target = $region76
        $region75: #{tpu_custom_call.1} parent=51 // pred_region
          %s1298 = ssub.s32 128, 128
          %1299 = vsyncadd %s1285, %s1298
          %s1300 = sadd.s32 %s38, %s39
          %s1301 = sadd.s32 %s1300, %s37
          %s1302 = smul.addr %s1301, 128
          %s1303 = scalar_lea.hbm %s8, %s1302
          %s1305 = sshll.u32 %s1288, 4
          %s1306 = int_to_ptr.vmem [resolvable:$true] %s1305
          %1308 = dma.vmem_to_hbm [thread:$0]  %s1306, 128, %s1303, %s1285
        $region76: #{tpu_custom_call.1} parent=51 // pred_fallthru
          _
        // Predicated region
        $region77: #{tpu_custom_call.1} parent=51 // pred_check
          %p1309 = pneg %p281
        $region78: #{tpu_custom_call.1} parent=51 // pred_check_branch
          %1311 = sbr.rel (%p1309) target = $region80
        $region79: #{tpu_custom_call.1} parent=51 // pred_region
          %s1312 = smul.u32 4, %s38
          %s1314 = ssub.s32 512, 512
          %1315 = vsyncadd %s1290, %s1314
          %s1316 = sadd.s32 %s39, %s1312
          %s1317 = smul.addr %s37, 4
          %s1318 = sadd.s32 %s1316, %s1317
          %s1319 = smul.addr %s1318, 128
          %s1320 = scalar_lea.hbm %s9, %s1319
          %s1321 = sshll.u32 %s1293, 4
          %s1322 = int_to_ptr.vmem [resolvable:$true] %s1321
          %1327 = dma.vmem_to_hbm [thread:$0]  %s1322, 512, %s1320, %s1290, 128, 128, 8
        $region80: #{tpu_custom_call.1} parent=51 // pred_fallthru
          _
      $region52: #{tpu_custom_call.1} parent=5 // pred_fallthru
        _
      %p1328 = scmp.le.s32.totalorder 2, %s27
      // Predicated region
      $region81: #{tpu_custom_call.1} parent=5 // pred_check
        %p1329 = pneg %p1328
      $region82: #{tpu_custom_call.1} parent=5 // pred_check_branch
        %1331 = sbr.rel (%p1329) target = $region84
      $region83: #{tpu_custom_call.1} parent=5 // pred_region
        %s1332 = ssub.s32 %s27, 2
        // Predicated region
        $region85: #{tpu_custom_call.1} parent=83 // pred_check
          %p1333 = pneg %p257
        $region86: #{tpu_custom_call.1} parent=83 // pred_check_branch
          %1335 = sbr.rel (%p1333) target = $region88
        $region87: #{tpu_custom_call.1} parent=83 // pred_region
          %s1336 = sand.u32 %s242, 1
          %s1337 = scalar_lea.sflag [#allocation7], %s1336
          %s1338 = sand.u32 %s242, 1
          %s1339 = smul.addr %s1338, 8
          %s1340 = scalar_lea.vmem [#allocation13], %s1339
          %1341 = dma.done %s1337, 128
        $region88: #{tpu_custom_call.1} parent=83 // pred_fallthru
          _
        // Predicated region
        $region89: #{tpu_custom_call.1} parent=83 // pred_check
          %p1342 = pneg %p287
        $region90: #{tpu_custom_call.1} parent=83 // pred_check_branch
          %1344 = sbr.rel (%p1342) target = $region92
        $region91: #{tpu_custom_call.1} parent=83 // pred_region
          %s1345 = sand.u32 %s272, 1
          %s1346 = scalar_lea.sflag [#allocation15], %s1345
          %s1347 = sand.u32 %s272, 1
          %s1348 = smul.addr %s1347, 32
          %s1349 = scalar_lea.vmem [#allocation14], %s1348
          %1350 = dma.done %s1346, 512
        $region92: #{tpu_custom_call.1} parent=83 // pred_fallthru
          _
      $region84: #{tpu_custom_call.1} parent=5 // pred_fallthru
        _
    $region6: #{tpu_custom_call.1} parent=1 // loop_footer
      %s31 = sadd.s32 1, %s27
    $region7: #{tpu_custom_call.1} parent=1 // loop_footer_branch
      %26 = sbr.rel target = $region3
    $region8: #{tpu_custom_call.1} parent=1 // loop_exit
      _
    %1351 = vsyncpa [#allocation6], 1
    %s1352 = scalar_lea.sflag [#allocation6], 1
    %1353 = vsyncpa %s1352, 1
    %1354 = vsyncpa [#allocation9], 1
    %1355 = vsyncpa [#allocation12], 1
    %1356 = vsyncpa [#allocation7], 1
    %s1357 = scalar_lea.sflag [#allocation7], 1
    %1358 = vsyncpa %s1357, 1
    %1359 = vsyncpa [#allocation15], 1
    %s1360 = scalar_lea.sflag [#allocation15], 1
    %1361 = vsyncpa %s1360, 1

</llo_original>
